<compile_context>
chip_gen: v6e
topology: v6e:2x2x1
jax: 0.10.0
libtpu: 0.0.40
codegen_flags: <defaults>
</compile_context>

<pallas_src>
import jax
import jax.numpy as jnp
from jax.experimental import pallas as pl
from jax.experimental.pallas import tpu as pltpu


NEG_SLOPE = 0.01  # PyTorch F.leaky_relu default


def _leaky_relu(x):
    return jnp.where(x > 0, x, NEG_SLOPE * x)


def _round_up(n, m):
    return ((n + m - 1) // m) * m


def policy_kernel(xT_ref, w1b_ref, w2b_ref, out_ref):
    # xT_ref : (In, B_TILE)      batch on the lane axis (lane-dense)
    # w1b_ref: (H, In + 1)       last column = b1
    # w2b_ref: (O, H + 1)        last column = b2
    # out_ref: (O, B_TILE)       lane-dense log-probs (transposed back by caller)
    k_in = xT_ref.shape[0]
    hid = w1b_ref.shape[0]
    n_out = out_ref.shape[0]

    xT = xT_ref[...]
    w1b = w1b_ref[...]
    w2b = w2b_ref[...]

    # ---- Layer 1: K=4 rank-1 VPU accumulation (bias folded into first FMA) ----
    # hT[j, b] = b1[j] + sum_k W1[j, k] * x[b, k]
    hT = w1b[:, k_in:k_in + 1] + w1b[:, 0:1] * xT[0:1, :]      # (H,1)*(1,B)->(H,B)
    for k in range(1, k_in):
        hT = hT + w1b[:, k:k + 1] * xT[k:k + 1, :]
    hT = _leaky_relu(hT)

    # ---- Layer 2: K=H rank-1 VPU accumulation in exact f32 --------------------
    # (review alternative to an MXU dot: avoids bf16 default-precision passes and
    #  the M=2 alignment question; cost is negligible for this overhead-bound op)
    oT = w2b[:, hid:hid + 1] + w2b[:, 0:1] * hT[0:1, :]        # (O,1)*(1,B)->(O,B)
    for j in range(1, hid):
        oT = oT + w2b[:, j:j + 1] * hT[j:j + 1, :]
    oT = _leaky_relu(oT)

    # ---- log_softmax over the class (sublane) axis -----------------------------
    if n_out == 2:
        o0 = oT[0:1, :]
        o1 = oT[1:2, :]
        m = jnp.maximum(o0, o1)
        lse = m + jnp.log(jnp.exp(o0 - m) + jnp.exp(o1 - m))
    else:
        m = jnp.max(oT, axis=0, keepdims=True)
        lse = m + jnp.log(jnp.sum(jnp.exp(oT - m), axis=0, keepdims=True))
    out_ref[...] = oT - lse


def prepare_policy_params(w1, b1, w2, b2):
    """One-time (per weight update) fusion of biases into the weight slabs.

    Hoisted out of the per-call path per review: w1b=(H, In+1), w2b=(O, H+1).
    """
    hid, _ = w1.shape
    n_out, _ = w2.shape
    w1b = jnp.concatenate(
        [w1.astype(jnp.float32), b1.reshape(hid, 1).astype(jnp.float32)], axis=1)
    w2b = jnp.concatenate(
        [w2.astype(jnp.float32), b2.reshape(n_out, 1).astype(jnp.float32)], axis=1)
    return w1b, w2b


def policy_forward_T(xT, w1b, w2b):
    """Lane-dense entry point: xT is (In, B); returns (O, B) log-probs.

    Use this directly if the consumer (sampler / loss) can take the transposed
    layout — it avoids both batch-axis transposes entirely.
    """
    k_in, B = xT.shape
    hid = w1b.shape[0]
    n_out = w2b.shape[0]

    # --- Tiling: single grid step unless the rollout batch is genuinely large. ---
    # Per-grid-step overhead is ~0.35 us; at CartPole sizes the whole batch fits
    # one tile (VMEM use is a few tens of KB), so collapse the grid to 1 step.
    bp_lane = _round_up(B, 128)
    if bp_lane <= 4096:
        b_tile = bp_lane
    else:
        b_tile = 1024                      # measured mem-bound sweet spot
    Bp = _round_up(B, b_tile)
    n_steps = Bp // b_tile

    xT_p = xT.astype(jnp.float32)
    if Bp != B:
        xT_p = jnp.pad(xT_p, ((0, 0), (0, Bp - B)))

    # On v7x, CORE_PARALLEL on the batch axis only pays for very large rollout
    # batches (tens of thousands of rows); at this scale grid=1 is faster on all
    # generations, so keep the portable semantics.
    dims = ("arbitrary",) if n_steps == 1 else ("parallel",)

    cost = pl.CostEstimate(
        flops=2 * B * (k_in * hid + hid * n_out),
        transcendentals=3 * B,
        bytes_accessed=4 * (k_in * Bp + n_out * Bp + w1b.size + w2b.size),
    )

    grid_spec = pltpu.PrefetchScalarGridSpec(
        num_scalar_prefetch=0,
        grid=(n_steps,),
        in_specs=[
            pl.BlockSpec((k_in, b_tile), lambda i: (0, i)),      # streamed x tiles
            pl.BlockSpec((hid, k_in + 1), lambda i: (0, 0)),     # resident W1|b1
            pl.BlockSpec((n_out, hid + 1), lambda i: (0, 0)),    # resident W2|b2
        ],
        out_specs=pl.BlockSpec((n_out, b_tile), lambda i: (0, i)),
    )

    out_T = pl.pallas_call(
        policy_kernel,
        out_shape=jax.ShapeDtypeStruct((n_out, Bp), jnp.float32),
        grid_spec=grid_spec,
        compiler_params=pltpu.CompilerParams(dimension_semantics=dims),
        cost_estimate=cost,
    )(xT_p, w1b, w2b)

    return out_T[:, :B]


def policy_forward(x, w1b, w2b):
    """PyTorch-layout wrapper: x is (B, In); returns (B, O) log-probs."""
    return policy_forward_T(x.T, w1b, w2b).T


def reference_forward(x, w1, b1, w2, b2):
    hp = jax.lax.Precision.HIGHEST   # exact-ish f32 so the 1e-5 check is meaningful
    h = jax.nn.leaky_relu(jnp.dot(x, w1.T, precision=hp) + b1, NEG_SLOPE)
    o = jax.nn.leaky_relu(jnp.dot(h, w2.T, precision=hp) + b2, NEG_SLOPE)
    return jax.nn.log_softmax(o, axis=-1)


if __name__ == "__main__":
    # CartPole-like sizes: input=4 (observation), hidden=32, output=2 (actions).
    # Rollout-sized batch; with the new tiling this is a single grid step.
    batch, input_size, hidden_size, output_size = 1024, 4, 32, 2

    key = jax.random.PRNGKey(0)
    kx, kw1, kb1, kw2, kb2 = jax.random.split(key, 5)

    # Deterministic init mimicking nn.Linear: U(-1/sqrt(fan_in), 1/sqrt(fan_in)).
    bound1 = 1.0 / jnp.sqrt(jnp.float32(input_size))
    bound2 = 1.0 / jnp.sqrt(jnp.float32(hidden_size))

    x = jax.random.normal(kx, (batch, input_size), dtype=jnp.float32)
    w1 = jax.random.uniform(kw1, (hidden_size, input_size), jnp.float32,
                            -bound1, bound1)
    b1 = jax.random.uniform(kb1, (hidden_size,), jnp.float32, -bound1, bound1)
    w2 = jax.random.uniform(kw2, (output_size, hidden_size), jnp.float32,
                            -bound2, bound2)
    b2 = jax.random.uniform(kb2, (output_size,), jnp.float32, -bound2, bound2)

    # One-time weight/bias fusion (out of the per-call hot path).
    w1b, w2b = prepare_policy_params(w1, b1, w2, b2)

    fwd = jax.jit(policy_forward)
    out = fwd(x, w1b, w2b)
    jax.block_until_ready(out)

    ref = reference_forward(x, w1, b1, w2, b2)
    assert out.shape == (batch, output_size)
    assert jnp.allclose(out, ref, atol=1e-5, rtol=1e-4), "mismatch vs reference"

    print("KERNEL_OK")
</pallas_src>

<mosaic_0001>
module attributes {stable_mosaic.version = 11 : i64} {
  func.func @policy_kernel(%arg0: i32, %arg1: memref<4x1024xf32, #tpu.memory_space<vmem>>, %arg2: memref<32x5xf32, #tpu.memory_space<vmem>>, %arg3: memref<2x33xf32, #tpu.memory_space<vmem>>, %arg4: memref<2x1024xf32, #tpu.memory_space<vmem>>) attributes {dimension_semantics = [#tpu.dimension_semantics<arbitrary>], iteration_bounds = array<i64: 1>, scalar_prefetch = 0 : i64, scratch_operands = 0 : i64, tpu.core_type = #tpu.core_type<tc>, window_params = [{transform_indices = @transform_0, window_bounds = array<i64: 4, 1024>}, {pipeline_mode = #tpu.pipeline_mode<synchronous>, transform_indices = @transform_1, window_bounds = array<i64: 32, 5>}, {pipeline_mode = #tpu.pipeline_mode<synchronous>, transform_indices = @transform_2, window_bounds = array<i64: 2, 33>}, {transform_indices = @transform_3, window_bounds = array<i64: 2, 1024>}]} {
    %c0 = arith.constant 0 : index
    %c0_0 = arith.constant 0 : index
    %0 = vector.load %arg1[%c0, %c0_0] : memref<4x1024xf32, #tpu.memory_space<vmem>>, vector<4x1024xf32>
    %c0_1 = arith.constant 0 : index
    %c0_2 = arith.constant 0 : index
    %1 = vector.load %arg2[%c0_1, %c0_2] : memref<32x5xf32, #tpu.memory_space<vmem>>, vector<32x5xf32>
    %c0_3 = arith.constant 0 : index
    %c0_4 = arith.constant 0 : index
    %2 = vector.load %arg3[%c0_3, %c0_4] : memref<2x33xf32, #tpu.memory_space<vmem>>, vector<2x33xf32>
    %3 = vector.extract_strided_slice %1 {offsets = [0, 4], sizes = [32, 1], strides = [1, 1]} : vector<32x5xf32> to vector<32x1xf32>
    %4 = vector.extract_strided_slice %1 {offsets = [0, 0], sizes = [32, 1], strides = [1, 1]} : vector<32x5xf32> to vector<32x1xf32>
    %5 = vector.extract_strided_slice %0 {offsets = [0, 0], sizes = [1, 1024], strides = [1, 1]} : vector<4x1024xf32> to vector<1x1024xf32>
    %6 = vector.broadcast %4 : vector<32x1xf32> to vector<32x1024xf32>
    %7 = vector.broadcast %5 : vector<1x1024xf32> to vector<32x1024xf32>
    %8 = arith.mulf %6, %7 : vector<32x1024xf32>
    %9 = vector.broadcast %3 : vector<32x1xf32> to vector<32x1024xf32>
    %10 = arith.addf %9, %8 : vector<32x1024xf32>
    %11 = vector.extract_strided_slice %1 {offsets = [0, 1], sizes = [32, 1], strides = [1, 1]} : vector<32x5xf32> to vector<32x1xf32>
    %12 = vector.extract_strided_slice %0 {offsets = [1, 0], sizes = [1, 1024], strides = [1, 1]} : vector<4x1024xf32> to vector<1x1024xf32>
    %13 = vector.broadcast %11 : vector<32x1xf32> to vector<32x1024xf32>
    %14 = vector.broadcast %12 : vector<1x1024xf32> to vector<32x1024xf32>
    %15 = arith.mulf %13, %14 : vector<32x1024xf32>
    %16 = arith.addf %10, %15 : vector<32x1024xf32>
    %17 = vector.extract_strided_slice %1 {offsets = [0, 2], sizes = [32, 1], strides = [1, 1]} : vector<32x5xf32> to vector<32x1xf32>
    %18 = vector.extract_strided_slice %0 {offsets = [2, 0], sizes = [1, 1024], strides = [1, 1]} : vector<4x1024xf32> to vector<1x1024xf32>
    %19 = vector.broadcast %17 : vector<32x1xf32> to vector<32x1024xf32>
    %20 = vector.broadcast %18 : vector<1x1024xf32> to vector<32x1024xf32>
    %21 = arith.mulf %19, %20 : vector<32x1024xf32>
    %22 = arith.addf %16, %21 : vector<32x1024xf32>
    %23 = vector.extract_strided_slice %1 {offsets = [0, 3], sizes = [32, 1], strides = [1, 1]} : vector<32x5xf32> to vector<32x1xf32>
    %24 = vector.extract_strided_slice %0 {offsets = [3, 0], sizes = [1, 1024], strides = [1, 1]} : vector<4x1024xf32> to vector<1x1024xf32>
    %25 = vector.broadcast %23 : vector<32x1xf32> to vector<32x1024xf32>
    %26 = vector.broadcast %24 : vector<1x1024xf32> to vector<32x1024xf32>
    %27 = arith.mulf %25, %26 : vector<32x1024xf32>
    %28 = arith.addf %22, %27 : vector<32x1024xf32>
    %cst = arith.constant 0.000000e+00 : f32
    %29 = vector.broadcast %cst : f32 to vector<32x1024xf32>
    %30 = arith.cmpf ogt, %28, %29 : vector<32x1024xf32>
    %cst_5 = arith.constant 0.00999999977 : f32
    %31 = vector.broadcast %cst_5 : f32 to vector<32x1024xf32>
    %32 = arith.mulf %31, %28 : vector<32x1024xf32>
    %33 = arith.select %30, %28, %32 : vector<32x1024xi1>, vector<32x1024xf32>
    %34 = vector.extract_strided_slice %2 {offsets = [0, 32], sizes = [2, 1], strides = [1, 1]} : vector<2x33xf32> to vector<2x1xf32>
    %35 = vector.extract_strided_slice %2 {offsets = [0, 0], sizes = [2, 1], strides = [1, 1]} : vector<2x33xf32> to vector<2x1xf32>
    %36 = vector.extract_strided_slice %33 {offsets = [0, 0], sizes = [1, 1024], strides = [1, 1]} : vector<32x1024xf32> to vector<1x1024xf32>
    %37 = vector.broadcast %35 : vector<2x1xf32> to vector<2x1024xf32>
    %38 = vector.broadcast %36 : vector<1x1024xf32> to vector<2x1024xf32>
    %39 = arith.mulf %37, %38 : vector<2x1024xf32>
    %40 = vector.broadcast %34 : vector<2x1xf32> to vector<2x1024xf32>
    %41 = arith.addf %40, %39 : vector<2x1024xf32>
    %42 = vector.extract_strided_slice %2 {offsets = [0, 1], sizes = [2, 1], strides = [1, 1]} : vector<2x33xf32> to vector<2x1xf32>
    %43 = vector.extract_strided_slice %33 {offsets = [1, 0], sizes = [1, 1024], strides = [1, 1]} : vector<32x1024xf32> to vector<1x1024xf32>
    %44 = vector.broadcast %42 : vector<2x1xf32> to vector<2x1024xf32>
    %45 = vector.broadcast %43 : vector<1x1024xf32> to vector<2x1024xf32>
    %46 = arith.mulf %44, %45 : vector<2x1024xf32>
    %47 = arith.addf %41, %46 : vector<2x1024xf32>
    %48 = vector.extract_strided_slice %2 {offsets = [0, 2], sizes = [2, 1], strides = [1, 1]} : vector<2x33xf32> to vector<2x1xf32>
    %49 = vector.extract_strided_slice %33 {offsets = [2, 0], sizes = [1, 1024], strides = [1, 1]} : vector<32x1024xf32> to vector<1x1024xf32>
    %50 = vector.broadcast %48 : vector<2x1xf32> to vector<2x1024xf32>
    %51 = vector.broadcast %49 : vector<1x1024xf32> to vector<2x1024xf32>
    %52 = arith.mulf %50, %51 : vector<2x1024xf32>
    %53 = arith.addf %47, %52 : vector<2x1024xf32>
    %54 = vector.extract_strided_slice %2 {offsets = [0, 3], sizes = [2, 1], strides = [1, 1]} : vector<2x33xf32> to vector<2x1xf32>
    %55 = vector.extract_strided_slice %33 {offsets = [3, 0], sizes = [1, 1024], strides = [1, 1]} : vector<32x1024xf32> to vector<1x1024xf32>
    %56 = vector.broadcast %54 : vector<2x1xf32> to vector<2x1024xf32>
    %57 = vector.broadcast %55 : vector<1x1024xf32> to vector<2x1024xf32>
    %58 = arith.mulf %56, %57 : vector<2x1024xf32>
    %59 = arith.addf %53, %58 : vector<2x1024xf32>
    %60 = vector.extract_strided_slice %2 {offsets = [0, 4], sizes = [2, 1], strides = [1, 1]} : vector<2x33xf32> to vector<2x1xf32>
    %61 = vector.extract_strided_slice %33 {offsets = [4, 0], sizes = [1, 1024], strides = [1, 1]} : vector<32x1024xf32> to vector<1x1024xf32>
    %62 = vector.broadcast %60 : vector<2x1xf32> to vector<2x1024xf32>
    %63 = vector.broadcast %61 : vector<1x1024xf32> to vector<2x1024xf32>
    %64 = arith.mulf %62, %63 : vector<2x1024xf32>
    %65 = arith.addf %59, %64 : vector<2x1024xf32>
    %66 = vector.extract_strided_slice %2 {offsets = [0, 5], sizes = [2, 1], strides = [1, 1]} : vector<2x33xf32> to vector<2x1xf32>
    %67 = vector.extract_strided_slice %33 {offsets = [5, 0], sizes = [1, 1024], strides = [1, 1]} : vector<32x1024xf32> to vector<1x1024xf32>
    %68 = vector.broadcast %66 : vector<2x1xf32> to vector<2x1024xf32>
    %69 = vector.broadcast %67 : vector<1x1024xf32> to vector<2x1024xf32>
    %70 = arith.mulf %68, %69 : vector<2x1024xf32>
    %71 = arith.addf %65, %70 : vector<2x1024xf32>
    %72 = vector.extract_strided_slice %2 {offsets = [0, 6], sizes = [2, 1], strides = [1, 1]} : vector<2x33xf32> to vector<2x1xf32>
    %73 = vector.extract_strided_slice %33 {offsets = [6, 0], sizes = [1, 1024], strides = [1, 1]} : vector<32x1024xf32> to vector<1x1024xf32>
    %74 = vector.broadcast %72 : vector<2x1xf32> to vector<2x1024xf32>
    %75 = vector.broadcast %73 : vector<1x1024xf32> to vector<2x1024xf32>
    %76 = arith.mulf %74, %75 : vector<2x1024xf32>
    %77 = arith.addf %71, %76 : vector<2x1024xf32>
    %78 = vector.extract_strided_slice %2 {offsets = [0, 7], sizes = [2, 1], strides = [1, 1]} : vector<2x33xf32> to vector<2x1xf32>
    %79 = vector.extract_strided_slice %33 {offsets = [7, 0], sizes = [1, 1024], strides = [1, 1]} : vector<32x1024xf32> to vector<1x1024xf32>
    %80 = vector.broadcast %78 : vector<2x1xf32> to vector<2x1024xf32>
    %81 = vector.broadcast %79 : vector<1x1024xf32> to vector<2x1024xf32>
    %82 = arith.mulf %80, %81 : vector<2x1024xf32>
    %83 = arith.addf %77, %82 : vector<2x1024xf32>
    %84 = vector.extract_strided_slice %2 {offsets = [0, 8], sizes = [2, 1], strides = [1, 1]} : vector<2x33xf32> to vector<2x1xf32>
    %85 = vector.extract_strided_slice %33 {offsets = [8, 0], sizes = [1, 1024], strides = [1, 1]} : vector<32x1024xf32> to vector<1x1024xf32>
    %86 = vector.broadcast %84 : vector<2x1xf32> to vector<2x1024xf32>
    %87 = vector.broadcast %85 : vector<1x1024xf32> to vector<2x1024xf32>
    %88 = arith.mulf %86, %87 : vector<2x1024xf32>
    %89 = arith.addf %83, %88 : vector<2x1024xf32>
    %90 = vector.extract_strided_slice %2 {offsets = [0, 9], sizes = [2, 1], strides = [1, 1]} : vector<2x33xf32> to vector<2x1xf32>
    %91 = vector.extract_strided_slice %33 {offsets = [9, 0], sizes = [1, 1024], strides = [1, 1]} : vector<32x1024xf32> to vector<1x1024xf32>
    %92 = vector.broadcast %90 : vector<2x1xf32> to vector<2x1024xf32>
    %93 = vector.broadcast %91 : vector<1x1024xf32> to vector<2x1024xf32>
    %94 = arith.mulf %92, %93 : vector<2x1024xf32>
    %95 = arith.addf %89, %94 : vector<2x1024xf32>
    %96 = vector.extract_strided_slice %2 {offsets = [0, 10], sizes = [2, 1], strides = [1, 1]} : vector<2x33xf32> to vector<2x1xf32>
    %97 = vector.extract_strided_slice %33 {offsets = [10, 0], sizes = [1, 1024], strides = [1, 1]} : vector<32x1024xf32> to vector<1x1024xf32>
    %98 = vector.broadcast %96 : vector<2x1xf32> to vector<2x1024xf32>
    %99 = vector.broadcast %97 : vector<1x1024xf32> to vector<2x1024xf32>
    %100 = arith.mulf %98, %99 : vector<2x1024xf32>
    %101 = arith.addf %95, %100 : vector<2x1024xf32>
    %102 = vector.extract_strided_slice %2 {offsets = [0, 11], sizes = [2, 1], strides = [1, 1]} : vector<2x33xf32> to vector<2x1xf32>
    %103 = vector.extract_strided_slice %33 {offsets = [11, 0], sizes = [1, 1024], strides = [1, 1]} : vector<32x1024xf32> to vector<1x1024xf32>
    %104 = vector.broadcast %102 : vector<2x1xf32> to vector<2x1024xf32>
    %105 = vector.broadcast %103 : vector<1x1024xf32> to vector<2x1024xf32>
    %106 = arith.mulf %104, %105 : vector<2x1024xf32>
    %107 = arith.addf %101, %106 : vector<2x1024xf32>
    %108 = vector.extract_strided_slice %2 {offsets = [0, 12], sizes = [2, 1], strides = [1, 1]} : vector<2x33xf32> to vector<2x1xf32>
    %109 = vector.extract_strided_slice %33 {offsets = [12, 0], sizes = [1, 1024], strides = [1, 1]} : vector<32x1024xf32> to vector<1x1024xf32>
    %110 = vector.broadcast %108 : vector<2x1xf32> to vector<2x1024xf32>
    %111 = vector.broadcast %109 : vector<1x1024xf32> to vector<2x1024xf32>
    %112 = arith.mulf %110, %111 : vector<2x1024xf32>
    %113 = arith.addf %107, %112 : vector<2x1024xf32>
    %114 = vector.extract_strided_slice %2 {offsets = [0, 13], sizes = [2, 1], strides = [1, 1]} : vector<2x33xf32> to vector<2x1xf32>
    %115 = vector.extract_strided_slice %33 {offsets = [13, 0], sizes = [1, 1024], strides = [1, 1]} : vector<32x1024xf32> to vector<1x1024xf32>
    %116 = vector.broadcast %114 : vector<2x1xf32> to vector<2x1024xf32>
    %117 = vector.broadcast %115 : vector<1x1024xf32> to vector<2x1024xf32>
    %118 = arith.mulf %116, %117 : vector<2x1024xf32>
    %119 = arith.addf %113, %118 : vector<2x1024xf32>
    %120 = vector.extract_strided_slice %2 {offsets = [0, 14], sizes = [2, 1], strides = [1, 1]} : vector<2x33xf32> to vector<2x1xf32>
    %121 = vector.extract_strided_slice %33 {offsets = [14, 0], sizes = [1, 1024], strides = [1, 1]} : vector<32x1024xf32> to vector<1x1024xf32>
    %122 = vector.broadcast %120 : vector<2x1xf32> to vector<2x1024xf32>
    %123 = vector.broadcast %121 : vector<1x1024xf32> to vector<2x1024xf32>
    %124 = arith.mulf %122, %123 : vector<2x1024xf32>
    %125 = arith.addf %119, %124 : vector<2x1024xf32>
    %126 = vector.extract_strided_slice %2 {offsets = [0, 15], sizes = [2, 1], strides = [1, 1]} : vector<2x33xf32> to vector<2x1xf32>
    %127 = vector.extract_strided_slice %33 {offsets = [15, 0], sizes = [1, 1024], strides = [1, 1]} : vector<32x1024xf32> to vector<1x1024xf32>
    %128 = vector.broadcast %126 : vector<2x1xf32> to vector<2x1024xf32>
    %129 = vector.broadcast %127 : vector<1x1024xf32> to vector<2x1024xf32>
    %130 = arith.mulf %128, %129 : vector<2x1024xf32>
    %131 = arith.addf %125, %130 : vector<2x1024xf32>
    %132 = vector.extract_strided_slice %2 {offsets = [0, 16], sizes = [2, 1], strides = [1, 1]} : vector<2x33xf32> to vector<2x1xf32>
    %133 = vector.extract_strided_slice %33 {offsets = [16, 0], sizes = [1, 1024], strides = [1, 1]} : vector<32x1024xf32> to vector<1x1024xf32>
    %134 = vector.broadcast %132 : vector<2x1xf32> to vector<2x1024xf32>
    %135 = vector.broadcast %133 : vector<1x1024xf32> to vector<2x1024xf32>
    %136 = arith.mulf %134, %135 : vector<2x1024xf32>
    %137 = arith.addf %131, %136 : vector<2x1024xf32>
    %138 = vector.extract_strided_slice %2 {offsets = [0, 17], sizes = [2, 1], strides = [1, 1]} : vector<2x33xf32> to vector<2x1xf32>
    %139 = vector.extract_strided_slice %33 {offsets = [17, 0], sizes = [1, 1024], strides = [1, 1]} : vector<32x1024xf32> to vector<1x1024xf32>
    %140 = vector.broadcast %138 : vector<2x1xf32> to vector<2x1024xf32>
    %141 = vector.broadcast %139 : vector<1x1024xf32> to vector<2x1024xf32>
    %142 = arith.mulf %140, %141 : vector<2x1024xf32>
    %143 = arith.addf %137, %142 : vector<2x1024xf32>
    %144 = vector.extract_strided_slice %2 {offsets = [0, 18], sizes = [2, 1], strides = [1, 1]} : vector<2x33xf32> to vector<2x1xf32>
    %145 = vector.extract_strided_slice %33 {offsets = [18, 0], sizes = [1, 1024], strides = [1, 1]} : vector<32x1024xf32> to vector<1x1024xf32>
    %146 = vector.broadcast %144 : vector<2x1xf32> to vector<2x1024xf32>
    %147 = vector.broadcast %145 : vector<1x1024xf32> to vector<2x1024xf32>
    %148 = arith.mulf %146, %147 : vector<2x1024xf32>
    %149 = arith.addf %143, %148 : vector<2x1024xf32>
    %150 = vector.extract_strided_slice %2 {offsets = [0, 19], sizes = [2, 1], strides = [1, 1]} : vector<2x33xf32> to vector<2x1xf32>
    %151 = vector.extract_strided_slice %33 {offsets = [19, 0], sizes = [1, 1024], strides = [1, 1]} : vector<32x1024xf32> to vector<1x1024xf32>
    %152 = vector.broadcast %150 : vector<2x1xf32> to vector<2x1024xf32>
    %153 = vector.broadcast %151 : vector<1x1024xf32> to vector<2x1024xf32>
    %154 = arith.mulf %152, %153 : vector<2x1024xf32>
    %155 = arith.addf %149, %154 : vector<2x1024xf32>
    %156 = vector.extract_strided_slice %2 {offsets = [0, 20], sizes = [2, 1], strides = [1, 1]} : vector<2x33xf32> to vector<2x1xf32>
    %157 = vector.extract_strided_slice %33 {offsets = [20, 0], sizes = [1, 1024], strides = [1, 1]} : vector<32x1024xf32> to vector<1x1024xf32>
    %158 = vector.broadcast %156 : vector<2x1xf32> to vector<2x1024xf32>
    %159 = vector.broadcast %157 : vector<1x1024xf32> to vector<2x1024xf32>
    %160 = arith.mulf %158, %159 : vector<2x1024xf32>
    %161 = arith.addf %155, %160 : vector<2x1024xf32>
    %162 = vector.extract_strided_slice %2 {offsets = [0, 21], sizes = [2, 1], strides = [1, 1]} : vector<2x33xf32> to vector<2x1xf32>
    %163 = vector.extract_strided_slice %33 {offsets = [21, 0], sizes = [1, 1024], strides = [1, 1]} : vector<32x1024xf32> to vector<1x1024xf32>
    %164 = vector.broadcast %162 : vector<2x1xf32> to vector<2x1024xf32>
    %165 = vector.broadcast %163 : vector<1x1024xf32> to vector<2x1024xf32>
    %166 = arith.mulf %164, %165 : vector<2x1024xf32>
    %167 = arith.addf %161, %166 : vector<2x1024xf32>
    %168 = vector.extract_strided_slice %2 {offsets = [0, 22], sizes = [2, 1], strides = [1, 1]} : vector<2x33xf32> to vector<2x1xf32>
    %169 = vector.extract_strided_slice %33 {offsets = [22, 0], sizes = [1, 1024], strides = [1, 1]} : vector<32x1024xf32> to vector<1x1024xf32>
    %170 = vector.broadcast %168 : vector<2x1xf32> to vector<2x1024xf32>
    %171 = vector.broadcast %169 : vector<1x1024xf32> to vector<2x1024xf32>
    %172 = arith.mulf %170, %171 : vector<2x1024xf32>
    %173 = arith.addf %167, %172 : vector<2x1024xf32>
    %174 = vector.extract_strided_slice %2 {offsets = [0, 23], sizes = [2, 1], strides = [1, 1]} : vector<2x33xf32> to vector<2x1xf32>
    %175 = vector.extract_strided_slice %33 {offsets = [23, 0], sizes = [1, 1024], strides = [1, 1]} : vector<32x1024xf32> to vector<1x1024xf32>
    %176 = vector.broadcast %174 : vector<2x1xf32> to vector<2x1024xf32>
    %177 = vector.broadcast %175 : vector<1x1024xf32> to vector<2x1024xf32>
    %178 = arith.mulf %176, %177 : vector<2x1024xf32>
    %179 = arith.addf %173, %178 : vector<2x1024xf32>
    %180 = vector.extract_strided_slice %2 {offsets = [0, 24], sizes = [2, 1], strides = [1, 1]} : vector<2x33xf32> to vector<2x1xf32>
    %181 = vector.extract_strided_slice %33 {offsets = [24, 0], sizes = [1, 1024], strides = [1, 1]} : vector<32x1024xf32> to vector<1x1024xf32>
    %182 = vector.broadcast %180 : vector<2x1xf32> to vector<2x1024xf32>
    %183 = vector.broadcast %181 : vector<1x1024xf32> to vector<2x1024xf32>
    %184 = arith.mulf %182, %183 : vector<2x1024xf32>
    %185 = arith.addf %179, %184 : vector<2x1024xf32>
    %186 = vector.extract_strided_slice %2 {offsets = [0, 25], sizes = [2, 1], strides = [1, 1]} : vector<2x33xf32> to vector<2x1xf32>
    %187 = vector.extract_strided_slice %33 {offsets = [25, 0], sizes = [1, 1024], strides = [1, 1]} : vector<32x1024xf32> to vector<1x1024xf32>
    %188 = vector.broadcast %186 : vector<2x1xf32> to vector<2x1024xf32>
    %189 = vector.broadcast %187 : vector<1x1024xf32> to vector<2x1024xf32>
    %190 = arith.mulf %188, %189 : vector<2x1024xf32>
    %191 = arith.addf %185, %190 : vector<2x1024xf32>
    %192 = vector.extract_strided_slice %2 {offsets = [0, 26], sizes = [2, 1], strides = [1, 1]} : vector<2x33xf32> to vector<2x1xf32>
    %193 = vector.extract_strided_slice %33 {offsets = [26, 0], sizes = [1, 1024], strides = [1, 1]} : vector<32x1024xf32> to vector<1x1024xf32>
    %194 = vector.broadcast %192 : vector<2x1xf32> to vector<2x1024xf32>
    %195 = vector.broadcast %193 : vector<1x1024xf32> to vector<2x1024xf32>
    %196 = arith.mulf %194, %195 : vector<2x1024xf32>
    %197 = arith.addf %191, %196 : vector<2x1024xf32>
    %198 = vector.extract_strided_slice %2 {offsets = [0, 27], sizes = [2, 1], strides = [1, 1]} : vector<2x33xf32> to vector<2x1xf32>
    %199 = vector.extract_strided_slice %33 {offsets = [27, 0], sizes = [1, 1024], strides = [1, 1]} : vector<32x1024xf32> to vector<1x1024xf32>
    %200 = vector.broadcast %198 : vector<2x1xf32> to vector<2x1024xf32>
    %201 = vector.broadcast %199 : vector<1x1024xf32> to vector<2x1024xf32>
    %202 = arith.mulf %200, %201 : vector<2x1024xf32>
    %203 = arith.addf %197, %202 : vector<2x1024xf32>
    %204 = vector.extract_strided_slice %2 {offsets = [0, 28], sizes = [2, 1], strides = [1, 1]} : vector<2x33xf32> to vector<2x1xf32>
    %205 = vector.extract_strided_slice %33 {offsets = [28, 0], sizes = [1, 1024], strides = [1, 1]} : vector<32x1024xf32> to vector<1x1024xf32>
    %206 = vector.broadcast %204 : vector<2x1xf32> to vector<2x1024xf32>
    %207 = vector.broadcast %205 : vector<1x1024xf32> to vector<2x1024xf32>
    %208 = arith.mulf %206, %207 : vector<2x1024xf32>
    %209 = arith.addf %203, %208 : vector<2x1024xf32>
    %210 = vector.extract_strided_slice %2 {offsets = [0, 29], sizes = [2, 1], strides = [1, 1]} : vector<2x33xf32> to vector<2x1xf32>
    %211 = vector.extract_strided_slice %33 {offsets = [29, 0], sizes = [1, 1024], strides = [1, 1]} : vector<32x1024xf32> to vector<1x1024xf32>
    %212 = vector.broadcast %210 : vector<2x1xf32> to vector<2x1024xf32>
    %213 = vector.broadcast %211 : vector<1x1024xf32> to vector<2x1024xf32>
    %214 = arith.mulf %212, %213 : vector<2x1024xf32>
    %215 = arith.addf %209, %214 : vector<2x1024xf32>
    %216 = vector.extract_strided_slice %2 {offsets = [0, 30], sizes = [2, 1], strides = [1, 1]} : vector<2x33xf32> to vector<2x1xf32>
    %217 = vector.extract_strided_slice %33 {offsets = [30, 0], sizes = [1, 1024], strides = [1, 1]} : vector<32x1024xf32> to vector<1x1024xf32>
    %218 = vector.broadcast %216 : vector<2x1xf32> to vector<2x1024xf32>
    %219 = vector.broadcast %217 : vector<1x1024xf32> to vector<2x1024xf32>
    %220 = arith.mulf %218, %219 : vector<2x1024xf32>
    %221 = arith.addf %215, %220 : vector<2x1024xf32>
    %222 = vector.extract_strided_slice %2 {offsets = [0, 31], sizes = [2, 1], strides = [1, 1]} : vector<2x33xf32> to vector<2x1xf32>
    %223 = vector.extract_strided_slice %33 {offsets = [31, 0], sizes = [1, 1024], strides = [1, 1]} : vector<32x1024xf32> to vector<1x1024xf32>
    %224 = vector.broadcast %222 : vector<2x1xf32> to vector<2x1024xf32>
    %225 = vector.broadcast %223 : vector<1x1024xf32> to vector<2x1024xf32>
    %226 = arith.mulf %224, %225 : vector<2x1024xf32>
    %227 = arith.addf %221, %226 : vector<2x1024xf32>
    %cst_6 = arith.constant 0.000000e+00 : f32
    %228 = vector.broadcast %cst_6 : f32 to vector<2x1024xf32>
    %229 = arith.cmpf ogt, %227, %228 : vector<2x1024xf32>
    %cst_7 = arith.constant 0.00999999977 : f32
    %230 = vector.broadcast %cst_7 : f32 to vector<2x1024xf32>
    %231 = arith.mulf %230, %227 : vector<2x1024xf32>
    %232 = arith.select %229, %227, %231 : vector<2x1024xi1>, vector<2x1024xf32>
    %233 = vector.extract_strided_slice %232 {offsets = [0, 0], sizes = [1, 1024], strides = [1, 1]} : vector<2x1024xf32> to vector<1x1024xf32>
    %234 = vector.extract_strided_slice %232 {offsets = [1, 0], sizes = [1, 1024], strides = [1, 1]} : vector<2x1024xf32> to vector<1x1024xf32>
    %235 = arith.maximumf %233, %234 : vector<1x1024xf32>
    %236 = arith.subf %233, %235 : vector<1x1024xf32>
    %237 = math.exp %236 : vector<1x1024xf32>
    %238 = arith.subf %234, %235 : vector<1x1024xf32>
    %239 = math.exp %238 : vector<1x1024xf32>
    %240 = arith.addf %237, %239 : vector<1x1024xf32>
    %241 = math.log %240 : vector<1x1024xf32>
    %242 = arith.addf %235, %241 : vector<1x1024xf32>
    %243 = vector.broadcast %242 : vector<1x1024xf32> to vector<2x1024xf32>
    %244 = arith.subf %232, %243 : vector<2x1024xf32>
    %c0_8 = arith.constant 0 : index
    %c0_9 = arith.constant 0 : index
    %245 = vector.load %arg4[%c0_8, %c0_9] : memref<2x1024xf32, #tpu.memory_space<vmem>>, vector<2x1024xf32>
    tpu.vector_store %arg4[%c0_8, %c0_9], %244 {strides = array<i32>} : memref<2x1024xf32, #tpu.memory_space<vmem>>, vector<2x1024xf32>,
    return
  }
  func.func @transform_0(%arg0: i32) -> (i32, i32) {
    %c0_i32 = arith.constant 0 : i32
    %c0_i32_0 = arith.constant 0 : i32
    return %c0_i32, %arg0 : i32, i32
  }
  func.func @transform_1(%arg0: i32) -> (i32, i32) {
    %c0_i32 = arith.constant 0 : i32
    %c0_i32_0 = arith.constant 0 : i32
    %c0_i32_1 = arith.constant 0 : i32
    return %c0_i32, %c0_i32_0 : i32, i32
  }
  func.func @transform_2(%arg0: i32) -> (i32, i32) {
    %c0_i32 = arith.constant 0 : i32
    %c0_i32_0 = arith.constant 0 : i32
    %c0_i32_1 = arith.constant 0 : i32
    return %c0_i32, %c0_i32_0 : i32, i32
  }
  func.func @transform_3(%arg0: i32) -> (i32, i32) {
    %c0_i32 = arith.constant 0 : i32
    %c0_i32_0 = arith.constant 0 : i32
    return %c0_i32, %arg0 : i32, i32
  }
}

</mosaic_0001>

<llo_original>
// kernel: policy_forward.1
$region0: #{policy_forward.1}
  #allocation0 [shape = 'u32[]', space=smem, size = 0x4, offset = 0x4, fixed_abs, tag = 'smem constant byte address 0x4 - core index']
  #allocation1 [shape = 'u32[144,128]{1,0:T(1,128)}', space=vmem, size = 0x12000, scoped, tag = 'internal scratch']
  %s0 = inlined_call_operand.vmem [shape: f32[4,1024], index: 0, kind: input, shape index: {}]
  %s1 = inlined_call_operand.vmem [shape: f32[32,5], index: 1, kind: input, shape index: {}]
  %s2 = inlined_call_operand.vmem [shape: f32[2,33], index: 2, kind: input, shape index: {}]
  %s3 = inlined_call_operand.hbm [shape: f32[2,1024], index: 3, kind: output, shape index: {}]
  %s4 = sld [smem:[#allocation0]]
  $region22: #{policy_forward.1} parent=0
    _
  %s6 = ssub.s32 1, %s4
  %s7 = scalar_select 0, %s6, %s4
  $region1: #{policy_forward.1} parent=0
    #allocation2 [shape = 'u8[8192]{0}', space=vmem, size = 0x2000, scoped, tag = 'output window, operand 0, single buffered']
    #allocation3 [shape = 's32[1]{0}', space=sflag, size = 0x4, scoped, tag = 'scoped memory for policy_forward.1']
    %8 = vsyncpa [#allocation3], 0
    // Predicated region
    $region2: #{policy_forward.1} parent=1 // pred_check
      _
    $region3: #{policy_forward.1} parent=1 // pred_check_branch
      %10 = sbr.rel (0) target = $region5
    $region4: #{policy_forward.1} parent=1 // pred_region
      _
    $region5: #{policy_forward.1} parent=1 // pred_fallthru
      _
    // Predicated region
    $region6: #{policy_forward.1} parent=1 // pred_check
      _
    $region7: #{policy_forward.1} parent=1 // pred_check_branch
      %12 = sbr.rel (0) target = $region9
    $region8: #{policy_forward.1} parent=1 // pred_region
      _
    $region9: #{policy_forward.1} parent=1 // pred_fallthru
      _
    // Predicated region
    $region10: #{policy_forward.1} parent=1 // pred_check
      _
    $region11: #{policy_forward.1} parent=1 // pred_check_branch
      %14 = sbr.rel (0) target = $region13
    $region12: #{policy_forward.1} parent=1 // pred_region
      _
    $region13: #{policy_forward.1} parent=1 // pred_fallthru
      _
    %v15 = vld [vmem:[%s0] sm:$0xff]
    %v16 = vld [vmem:[%s0 + $0x8] sm:$0xff]
    %v17 = vld [vmem:[%s0 + $0x10] sm:$0xff]
    %v18 = vld [vmem:[%s0 + $0x18] sm:$0xff]
    %v19 = vld [vmem:[%s1] sm:$0xff]
    %v20 = vld [vmem:[%s1 + $0x8] sm:$0xff]
    %v21 = vld [vmem:[%s1 + $0x10] sm:$0xff]
    %v22 = vld [vmem:[%s1 + $0x18] sm:$0xff]
    %v23 = vld [vmem:[%s2] sm:$0x3]
    %25 = vset.pattern.permute.xlu0 0
    %26 = vperm.xlu0 %25, %v19
    %v27 = vpop.permute.xlu0 %26
    %30 = vset.pattern.permute.xlu0 0
    %31 = vperm.xlu0 %30, %v20
    %v32 = vpop.permute.xlu0 %31
    %35 = vset.pattern.permute.xlu0 0
    %36 = vperm.xlu0 %35, %v21
    %v37 = vpop.permute.xlu0 %36
    %40 = vset.pattern.permute.xlu0 0
    %41 = vperm.xlu0 %40, %v22
    %v42 = vpop.permute.xlu0 %41
    %v48 = vlaneseq
    %v49 = vshrl.u32 %v48, 7
    %v50 = vsub.s32 0, %v49
    %v51 = vrot.slane %v15, %v50
    %v52 = vlaneseq
    %v53 = vshrl.u32 %v52, 7
    %v54 = vsub.s32 4, %v53
    %v55 = vrot.slane %v15, %v54
    %v56 = vlaneseq
    %v57 = vshrl.u32 %v56, 7
    %v58 = vsub.s32 0, %v57
    %v59 = vrot.slane %v16, %v58
    %v60 = vlaneseq
    %v61 = vshrl.u32 %v60, 7
    %v62 = vsub.s32 4, %v61
    %v63 = vrot.slane %v16, %v62
    %v64 = vlaneseq
    %v65 = vshrl.u32 %v64, 7
    %v66 = vsub.s32 0, %v65
    %v67 = vrot.slane %v17, %v66
    %v68 = vlaneseq
    %v69 = vshrl.u32 %v68, 7
    %v70 = vsub.s32 4, %v69
    %v71 = vrot.slane %v17, %v70
    %v72 = vlaneseq
    %v73 = vshrl.u32 %v72, 7
    %v74 = vsub.s32 0, %v73
    %v75 = vrot.slane %v18, %v74
    %v76 = vlaneseq
    %v77 = vshrl.u32 %v76, 7
    %v78 = vsub.s32 4, %v77
    %v79 = vrot.slane %v18, %v78
    %v88 = vlaneseq
    %v89 = vshrl.u32 %v88, 7
    %v90 = vsub.s32 0, %v89
    %v91 = vrot.slane %v51, %v90
    %v92 = vlaneseq
    %v93 = vshrl.u32 %v92, 7
    %v94 = vsub.s32 0, %v93
    %v95 = vrot.slane %v55, %v94
    %v96 = vlaneseq
    %v97 = vshrl.u32 %v96, 7
    %v98 = vsub.s32 0, %v97
    %v99 = vrot.slane %v59, %v98
    %v100 = vlaneseq
    %v101 = vshrl.u32 %v100, 7
    %v102 = vsub.s32 0, %v101
    %v103 = vrot.slane %v63, %v102
    %v104 = vlaneseq
    %v105 = vshrl.u32 %v104, 7
    %v106 = vsub.s32 0, %v105
    %v107 = vrot.slane %v67, %v106
    %v108 = vlaneseq
    %v109 = vshrl.u32 %v108, 7
    %v110 = vsub.s32 0, %v109
    %v111 = vrot.slane %v71, %v110
    %v112 = vlaneseq
    %v113 = vshrl.u32 %v112, 7
    %v114 = vsub.s32 0, %v113
    %v115 = vrot.slane %v75, %v114
    %v116 = vlaneseq
    %v117 = vshrl.u32 %v116, 7
    %v118 = vsub.s32 0, %v117
    %v119 = vrot.slane %v79, %v118
    %v120 = vmul.f32 %v27, %v91
    %v121 = vmul.f32 %v27, %v95
    %v122 = vmul.f32 %v27, %v99
    %v123 = vmul.f32 %v27, %v103
    %v124 = vmul.f32 %v27, %v107
    %v125 = vmul.f32 %v27, %v111
    %v126 = vmul.f32 %v27, %v115
    %v127 = vmul.f32 %v27, %v119
    %v128 = vmul.f32 %v32, %v91
    %v129 = vmul.f32 %v32, %v95
    %v130 = vmul.f32 %v32, %v99
    %v131 = vmul.f32 %v32, %v103
    %v132 = vmul.f32 %v32, %v107
    %v133 = vmul.f32 %v32, %v111
    %v134 = vmul.f32 %v32, %v115
    %v135 = vmul.f32 %v32, %v119
    %v136 = vmul.f32 %v37, %v91
    %v137 = vmul.f32 %v37, %v95
    %v138 = vmul.f32 %v37, %v99
    %v139 = vmul.f32 %v37, %v103
    %v140 = vmul.f32 %v37, %v107
    %v141 = vmul.f32 %v37, %v111
    %v142 = vmul.f32 %v37, %v115
    %v143 = vmul.f32 %v37, %v119
    %v144 = vmul.f32 %v42, %v91
    %v145 = vmul.f32 %v42, %v95
    %v146 = vmul.f32 %v42, %v99
    %v147 = vmul.f32 %v42, %v103
    %v148 = vmul.f32 %v42, %v107
    %v149 = vmul.f32 %v42, %v111
    %v150 = vmul.f32 %v42, %v115
    %v151 = vmul.f32 %v42, %v119
    %152 = vset.pattern.permute.xlu0 4
    %153 = vperm.xlu0 %152, %v19
    %v154 = vpop.permute.xlu0 %153
    %156 = vset.pattern.permute.xlu0 4
    %157 = vperm.xlu0 %156, %v20
    %v158 = vpop.permute.xlu0 %157
    %160 = vset.pattern.permute.xlu0 4
    %161 = vperm.xlu0 %160, %v21
    %v162 = vpop.permute.xlu0 %161
    %164 = vset.pattern.permute.xlu0 4
    %165 = vperm.xlu0 %164, %v22
    %v166 = vpop.permute.xlu0 %165
    %v168 = vadd.f32 %v154, %v120
    %v169 = vadd.f32 %v154, %v121
    %v170 = vadd.f32 %v154, %v122
    %v171 = vadd.f32 %v154, %v123
    %v172 = vadd.f32 %v154, %v124
    %v173 = vadd.f32 %v154, %v125
    %v174 = vadd.f32 %v154, %v126
    %v175 = vadd.f32 %v154, %v127
    %v176 = vadd.f32 %v158, %v128
    %v177 = vadd.f32 %v158, %v129
    %v178 = vadd.f32 %v158, %v130
    %v179 = vadd.f32 %v158, %v131
    %v180 = vadd.f32 %v158, %v132
    %v181 = vadd.f32 %v158, %v133
    %v182 = vadd.f32 %v158, %v134
    %v183 = vadd.f32 %v158, %v135
    %v184 = vadd.f32 %v162, %v136
    %v185 = vadd.f32 %v162, %v137
    %v186 = vadd.f32 %v162, %v138
    %v187 = vadd.f32 %v162, %v139
    %v188 = vadd.f32 %v162, %v140
    %v189 = vadd.f32 %v162, %v141
    %v190 = vadd.f32 %v162, %v142
    %v191 = vadd.f32 %v162, %v143
    %v192 = vadd.f32 %v166, %v144
    %v193 = vadd.f32 %v166, %v145
    %v194 = vadd.f32 %v166, %v146
    %v195 = vadd.f32 %v166, %v147
    %v196 = vadd.f32 %v166, %v148
    %v197 = vadd.f32 %v166, %v149
    %v198 = vadd.f32 %v166, %v150
    %v199 = vadd.f32 %v166, %v151
    %200 = vset.pattern.permute.xlu0 1
    %201 = vperm.xlu0 %200, %v19
    %v202 = vpop.permute.xlu0 %201
    %204 = vset.pattern.permute.xlu0 1
    %205 = vperm.xlu0 %204, %v20
    %v206 = vpop.permute.xlu0 %205
    %208 = vset.pattern.permute.xlu0 1
    %209 = vperm.xlu0 %208, %v21
    %v210 = vpop.permute.xlu0 %209
    %212 = vset.pattern.permute.xlu0 1
    %213 = vperm.xlu0 %212, %v22
    %v214 = vpop.permute.xlu0 %213
    %v216 = vlaneseq
    %v217 = vshrl.u32 %v216, 7
    %v218 = vsub.s32 1, %v217
    %v219 = vrot.slane %v15, %v218
    %v220 = vlaneseq
    %v221 = vshrl.u32 %v220, 7
    %v222 = vsub.s32 5, %v221
    %v223 = vrot.slane %v15, %v222
    %v224 = vlaneseq
    %v225 = vshrl.u32 %v224, 7
    %v226 = vsub.s32 1, %v225
    %v227 = vrot.slane %v16, %v226
    %v228 = vlaneseq
    %v229 = vshrl.u32 %v228, 7
    %v230 = vsub.s32 5, %v229
    %v231 = vrot.slane %v16, %v230
    %v232 = vlaneseq
    %v233 = vshrl.u32 %v232, 7
    %v234 = vsub.s32 1, %v233
    %v235 = vrot.slane %v17, %v234
    %v236 = vlaneseq
    %v237 = vshrl.u32 %v236, 7
    %v238 = vsub.s32 5, %v237
    %v239 = vrot.slane %v17, %v238
    %v240 = vlaneseq
    %v241 = vshrl.u32 %v240, 7
    %v242 = vsub.s32 1, %v241
    %v243 = vrot.slane %v18, %v242
    %v244 = vlaneseq
    %v245 = vshrl.u32 %v244, 7
    %v246 = vsub.s32 5, %v245
    %v247 = vrot.slane %v18, %v246
    %v256 = vlaneseq
    %v257 = vshrl.u32 %v256, 7
    %v258 = vsub.s32 1, %v257
    %v259 = vrot.slane %v219, %v258
    %v260 = vlaneseq
    %v261 = vshrl.u32 %v260, 7
    %v262 = vsub.s32 1, %v261
    %v263 = vrot.slane %v223, %v262
    %v264 = vlaneseq
    %v265 = vshrl.u32 %v264, 7
    %v266 = vsub.s32 1, %v265
    %v267 = vrot.slane %v227, %v266
    %v268 = vlaneseq
    %v269 = vshrl.u32 %v268, 7
    %v270 = vsub.s32 1, %v269
    %v271 = vrot.slane %v231, %v270
    %v272 = vlaneseq
    %v273 = vshrl.u32 %v272, 7
    %v274 = vsub.s32 1, %v273
    %v275 = vrot.slane %v235, %v274
    %v276 = vlaneseq
    %v277 = vshrl.u32 %v276, 7
    %v278 = vsub.s32 1, %v277
    %v279 = vrot.slane %v239, %v278
    %v280 = vlaneseq
    %v281 = vshrl.u32 %v280, 7
    %v282 = vsub.s32 1, %v281
    %v283 = vrot.slane %v243, %v282
    %v284 = vlaneseq
    %v285 = vshrl.u32 %v284, 7
    %v286 = vsub.s32 1, %v285
    %v287 = vrot.slane %v247, %v286
    %v288 = vmul.f32 %v202, %v259
    %v289 = vmul.f32 %v202, %v263
    %v290 = vmul.f32 %v202, %v267
    %v291 = vmul.f32 %v202, %v271
    %v292 = vmul.f32 %v202, %v275
    %v293 = vmul.f32 %v202, %v279
    %v294 = vmul.f32 %v202, %v283
    %v295 = vmul.f32 %v202, %v287
    %v296 = vmul.f32 %v206, %v259
    %v297 = vmul.f32 %v206, %v263
    %v298 = vmul.f32 %v206, %v267
    %v299 = vmul.f32 %v206, %v271
    %v300 = vmul.f32 %v206, %v275
    %v301 = vmul.f32 %v206, %v279
    %v302 = vmul.f32 %v206, %v283
    %v303 = vmul.f32 %v206, %v287
    %v304 = vmul.f32 %v210, %v259
    %v305 = vmul.f32 %v210, %v263
    %v306 = vmul.f32 %v210, %v267
    %v307 = vmul.f32 %v210, %v271
    %v308 = vmul.f32 %v210, %v275
    %v309 = vmul.f32 %v210, %v279
    %v310 = vmul.f32 %v210, %v283
    %v311 = vmul.f32 %v210, %v287
    %v312 = vmul.f32 %v214, %v259
    %v313 = vmul.f32 %v214, %v263
    %v314 = vmul.f32 %v214, %v267
    %v315 = vmul.f32 %v214, %v271
    %v316 = vmul.f32 %v214, %v275
    %v317 = vmul.f32 %v214, %v279
    %v318 = vmul.f32 %v214, %v283
    %v319 = vmul.f32 %v214, %v287
    %v320 = vadd.f32 %v168, %v288
    %v321 = vadd.f32 %v169, %v289
    %v322 = vadd.f32 %v170, %v290
    %v323 = vadd.f32 %v171, %v291
    %v324 = vadd.f32 %v172, %v292
    %v325 = vadd.f32 %v173, %v293
    %v326 = vadd.f32 %v174, %v294
    %v327 = vadd.f32 %v175, %v295
    %v328 = vadd.f32 %v176, %v296
    %v329 = vadd.f32 %v177, %v297
    %v330 = vadd.f32 %v178, %v298
    %v331 = vadd.f32 %v179, %v299
    %v332 = vadd.f32 %v180, %v300
    %v333 = vadd.f32 %v181, %v301
    %v334 = vadd.f32 %v182, %v302
    %v335 = vadd.f32 %v183, %v303
    %v336 = vadd.f32 %v184, %v304
    %v337 = vadd.f32 %v185, %v305
    %v338 = vadd.f32 %v186, %v306
    %v339 = vadd.f32 %v187, %v307
    %v340 = vadd.f32 %v188, %v308
    %v341 = vadd.f32 %v189, %v309
    %v342 = vadd.f32 %v190, %v310
    %v343 = vadd.f32 %v191, %v311
    %v344 = vadd.f32 %v192, %v312
    %v345 = vadd.f32 %v193, %v313
    %v346 = vadd.f32 %v194, %v314
    %v347 = vadd.f32 %v195, %v315
    %v348 = vadd.f32 %v196, %v316
    %v349 = vadd.f32 %v197, %v317
    %v350 = vadd.f32 %v198, %v318
    %v351 = vadd.f32 %v199, %v319
    %352 = vset.pattern.permute.xlu0 2
    %353 = vperm.xlu0 %352, %v19
    %v354 = vpop.permute.xlu0 %353
    %356 = vset.pattern.permute.xlu0 2
    %357 = vperm.xlu0 %356, %v20
    %v358 = vpop.permute.xlu0 %357
    %360 = vset.pattern.permute.xlu0 2
    %361 = vperm.xlu0 %360, %v21
    %v362 = vpop.permute.xlu0 %361
    %364 = vset.pattern.permute.xlu0 2
    %365 = vperm.xlu0 %364, %v22
    %v366 = vpop.permute.xlu0 %365
    %v368 = vlaneseq
    %v369 = vshrl.u32 %v368, 7
    %v370 = vsub.s32 2, %v369
    %v371 = vrot.slane %v15, %v370
    %v372 = vlaneseq
    %v373 = vshrl.u32 %v372, 7
    %v374 = vsub.s32 6, %v373
    %v375 = vrot.slane %v15, %v374
    %v376 = vlaneseq
    %v377 = vshrl.u32 %v376, 7
    %v378 = vsub.s32 2, %v377
    %v379 = vrot.slane %v16, %v378
    %v380 = vlaneseq
    %v381 = vshrl.u32 %v380, 7
    %v382 = vsub.s32 6, %v381
    %v383 = vrot.slane %v16, %v382
    %v384 = vlaneseq
    %v385 = vshrl.u32 %v384, 7
    %v386 = vsub.s32 2, %v385
    %v387 = vrot.slane %v17, %v386
    %v388 = vlaneseq
    %v389 = vshrl.u32 %v388, 7
    %v390 = vsub.s32 6, %v389
    %v391 = vrot.slane %v17, %v390
    %v392 = vlaneseq
    %v393 = vshrl.u32 %v392, 7
    %v394 = vsub.s32 2, %v393
    %v395 = vrot.slane %v18, %v394
    %v396 = vlaneseq
    %v397 = vshrl.u32 %v396, 7
    %v398 = vsub.s32 6, %v397
    %v399 = vrot.slane %v18, %v398
    %v408 = vlaneseq
    %v409 = vshrl.u32 %v408, 7
    %v410 = vsub.s32 2, %v409
    %v411 = vrot.slane %v371, %v410
    %v412 = vlaneseq
    %v413 = vshrl.u32 %v412, 7
    %v414 = vsub.s32 2, %v413
    %v415 = vrot.slane %v375, %v414
    %v416 = vlaneseq
    %v417 = vshrl.u32 %v416, 7
    %v418 = vsub.s32 2, %v417
    %v419 = vrot.slane %v379, %v418
    %v420 = vlaneseq
    %v421 = vshrl.u32 %v420, 7
    %v422 = vsub.s32 2, %v421
    %v423 = vrot.slane %v383, %v422
    %v424 = vlaneseq
    %v425 = vshrl.u32 %v424, 7
    %v426 = vsub.s32 2, %v425
    %v427 = vrot.slane %v387, %v426
    %v428 = vlaneseq
    %v429 = vshrl.u32 %v428, 7
    %v430 = vsub.s32 2, %v429
    %v431 = vrot.slane %v391, %v430
    %v432 = vlaneseq
    %v433 = vshrl.u32 %v432, 7
    %v434 = vsub.s32 2, %v433
    %v435 = vrot.slane %v395, %v434
    %v436 = vlaneseq
    %v437 = vshrl.u32 %v436, 7
    %v438 = vsub.s32 2, %v437
    %v439 = vrot.slane %v399, %v438
    %v440 = vmul.f32 %v354, %v411
    %v441 = vmul.f32 %v354, %v415
    %v442 = vmul.f32 %v354, %v419
    %v443 = vmul.f32 %v354, %v423
    %v444 = vmul.f32 %v354, %v427
    %v445 = vmul.f32 %v354, %v431
    %v446 = vmul.f32 %v354, %v435
    %v447 = vmul.f32 %v354, %v439
    %v448 = vmul.f32 %v358, %v411
    %v449 = vmul.f32 %v358, %v415
    %v450 = vmul.f32 %v358, %v419
    %v451 = vmul.f32 %v358, %v423
    %v452 = vmul.f32 %v358, %v427
    %v453 = vmul.f32 %v358, %v431
    %v454 = vmul.f32 %v358, %v435
    %v455 = vmul.f32 %v358, %v439
    %v456 = vmul.f32 %v362, %v411
    %v457 = vmul.f32 %v362, %v415
    %v458 = vmul.f32 %v362, %v419
    %v459 = vmul.f32 %v362, %v423
    %v460 = vmul.f32 %v362, %v427
    %v461 = vmul.f32 %v362, %v431
    %v462 = vmul.f32 %v362, %v435
    %v463 = vmul.f32 %v362, %v439
    %v464 = vmul.f32 %v366, %v411
    %v465 = vmul.f32 %v366, %v415
    %v466 = vmul.f32 %v366, %v419
    %v467 = vmul.f32 %v366, %v423
    %v468 = vmul.f32 %v366, %v427
    %v469 = vmul.f32 %v366, %v431
    %v470 = vmul.f32 %v366, %v435
    %v471 = vmul.f32 %v366, %v439
    %v472 = vadd.f32 %v320, %v440
    %v473 = vadd.f32 %v321, %v441
    %v474 = vadd.f32 %v322, %v442
    %v475 = vadd.f32 %v323, %v443
    %v476 = vadd.f32 %v324, %v444
    %v477 = vadd.f32 %v325, %v445
    %v478 = vadd.f32 %v326, %v446
    %v479 = vadd.f32 %v327, %v447
    %v480 = vadd.f32 %v328, %v448
    %v481 = vadd.f32 %v329, %v449
    %v482 = vadd.f32 %v330, %v450
    %v483 = vadd.f32 %v331, %v451
    %v484 = vadd.f32 %v332, %v452
    %v485 = vadd.f32 %v333, %v453
    %v486 = vadd.f32 %v334, %v454
    %v487 = vadd.f32 %v335, %v455
    %v488 = vadd.f32 %v336, %v456
    %v489 = vadd.f32 %v337, %v457
    %v490 = vadd.f32 %v338, %v458
    %v491 = vadd.f32 %v339, %v459
    %v492 = vadd.f32 %v340, %v460
    %v493 = vadd.f32 %v341, %v461
    %v494 = vadd.f32 %v342, %v462
    %v495 = vadd.f32 %v343, %v463
    %v496 = vadd.f32 %v344, %v464
    %v497 = vadd.f32 %v345, %v465
    %v498 = vadd.f32 %v346, %v466
    %v499 = vadd.f32 %v347, %v467
    %v500 = vadd.f32 %v348, %v468
    %v501 = vadd.f32 %v349, %v469
    %v502 = vadd.f32 %v350, %v470
    %v503 = vadd.f32 %v351, %v471
    %504 = vset.pattern.permute.xlu0 3
    %505 = vperm.xlu0 %504, %v19
    %v506 = vpop.permute.xlu0 %505
    %508 = vset.pattern.permute.xlu0 3
    %509 = vperm.xlu0 %508, %v20
    %v510 = vpop.permute.xlu0 %509
    %512 = vset.pattern.permute.xlu0 3
    %513 = vperm.xlu0 %512, %v21
    %v514 = vpop.permute.xlu0 %513
    %516 = vset.pattern.permute.xlu0 3
    %517 = vperm.xlu0 %516, %v22
    %v518 = vpop.permute.xlu0 %517
    %v520 = vlaneseq
    %v521 = vshrl.u32 %v520, 7
    %v522 = vsub.s32 3, %v521
    %v523 = vrot.slane %v15, %v522
    %v524 = vlaneseq
    %v525 = vshrl.u32 %v524, 7
    %v526 = vsub.s32 7, %v525
    %v527 = vrot.slane %v15, %v526
    %v528 = vlaneseq
    %v529 = vshrl.u32 %v528, 7
    %v530 = vsub.s32 3, %v529
    %v531 = vrot.slane %v16, %v530
    %v532 = vlaneseq
    %v533 = vshrl.u32 %v532, 7
    %v534 = vsub.s32 7, %v533
    %v535 = vrot.slane %v16, %v534
    %v536 = vlaneseq
    %v537 = vshrl.u32 %v536, 7
    %v538 = vsub.s32 3, %v537
    %v539 = vrot.slane %v17, %v538
    %v540 = vlaneseq
    %v541 = vshrl.u32 %v540, 7
    %v542 = vsub.s32 7, %v541
    %v543 = vrot.slane %v17, %v542
    %v544 = vlaneseq
    %v545 = vshrl.u32 %v544, 7
    %v546 = vsub.s32 3, %v545
    %v547 = vrot.slane %v18, %v546
    %v548 = vlaneseq
    %v549 = vshrl.u32 %v548, 7
    %v550 = vsub.s32 7, %v549
    %v551 = vrot.slane %v18, %v550
    %v560 = vlaneseq
    %v561 = vshrl.u32 %v560, 7
    %v562 = vsub.s32 3, %v561
    %v563 = vrot.slane %v523, %v562
    %v564 = vlaneseq
    %v565 = vshrl.u32 %v564, 7
    %v566 = vsub.s32 3, %v565
    %v567 = vrot.slane %v527, %v566
    %v568 = vlaneseq
    %v569 = vshrl.u32 %v568, 7
    %v570 = vsub.s32 3, %v569
    %v571 = vrot.slane %v531, %v570
    %v572 = vlaneseq
    %v573 = vshrl.u32 %v572, 7
    %v574 = vsub.s32 3, %v573
    %v575 = vrot.slane %v535, %v574
    %v576 = vlaneseq
    %v577 = vshrl.u32 %v576, 7
    %v578 = vsub.s32 3, %v577
    %v579 = vrot.slane %v539, %v578
    %v580 = vlaneseq
    %v581 = vshrl.u32 %v580, 7
    %v582 = vsub.s32 3, %v581
    %v583 = vrot.slane %v543, %v582
    %v584 = vlaneseq
    %v585 = vshrl.u32 %v584, 7
    %v586 = vsub.s32 3, %v585
    %v587 = vrot.slane %v547, %v586
    %v588 = vlaneseq
    %v589 = vshrl.u32 %v588, 7
    %v590 = vsub.s32 3, %v589
    %v591 = vrot.slane %v551, %v590
    %v592 = vmul.f32 %v506, %v563
    %v593 = vmul.f32 %v506, %v567
    %v594 = vmul.f32 %v506, %v571
    %v595 = vmul.f32 %v506, %v575
    %v596 = vmul.f32 %v506, %v579
    %v597 = vmul.f32 %v506, %v583
    %v598 = vmul.f32 %v506, %v587
    %v599 = vmul.f32 %v506, %v591
    %v600 = vmul.f32 %v510, %v563
    %v601 = vmul.f32 %v510, %v567
    %v602 = vmul.f32 %v510, %v571
    %v603 = vmul.f32 %v510, %v575
    %v604 = vmul.f32 %v510, %v579
    %v605 = vmul.f32 %v510, %v583
    %v606 = vmul.f32 %v510, %v587
    %v607 = vmul.f32 %v510, %v591
    %v608 = vmul.f32 %v514, %v563
    %v609 = vmul.f32 %v514, %v567
    %v610 = vmul.f32 %v514, %v571
    %v611 = vmul.f32 %v514, %v575
    %v612 = vmul.f32 %v514, %v579
    %v613 = vmul.f32 %v514, %v583
    %v614 = vmul.f32 %v514, %v587
    %v615 = vmul.f32 %v514, %v591
    %v616 = vmul.f32 %v518, %v563
    %v617 = vmul.f32 %v518, %v567
    %v618 = vmul.f32 %v518, %v571
    %v619 = vmul.f32 %v518, %v575
    %v620 = vmul.f32 %v518, %v579
    %v621 = vmul.f32 %v518, %v583
    %v622 = vmul.f32 %v518, %v587
    %v623 = vmul.f32 %v518, %v591
    %v624 = vadd.f32 %v472, %v592
    %v625 = vadd.f32 %v473, %v593
    %v626 = vadd.f32 %v474, %v594
    %v627 = vadd.f32 %v475, %v595
    %v628 = vadd.f32 %v476, %v596
    %v629 = vadd.f32 %v477, %v597
    %v630 = vadd.f32 %v478, %v598
    %v631 = vadd.f32 %v479, %v599
    %v632 = vadd.f32 %v480, %v600
    %v633 = vadd.f32 %v481, %v601
    %v634 = vadd.f32 %v482, %v602
    %v635 = vadd.f32 %v483, %v603
    %v636 = vadd.f32 %v484, %v604
    %v637 = vadd.f32 %v485, %v605
    %v638 = vadd.f32 %v486, %v606
    %v639 = vadd.f32 %v487, %v607
    %v640 = vadd.f32 %v488, %v608
    %v641 = vadd.f32 %v489, %v609
    %v642 = vadd.f32 %v490, %v610
    %v643 = vadd.f32 %v491, %v611
    %v644 = vadd.f32 %v492, %v612
    %v645 = vadd.f32 %v493, %v613
    %v646 = vadd.f32 %v494, %v614
    %v647 = vadd.f32 %v495, %v615
    %v648 = vadd.f32 %v496, %v616
    %v649 = vadd.f32 %v497, %v617
    %v650 = vadd.f32 %v498, %v618
    %v651 = vadd.f32 %v499, %v619
    %v652 = vadd.f32 %v500, %v620
    %v653 = vadd.f32 %v501, %v621
    %v654 = vadd.f32 %v502, %v622
    %v655 = vadd.f32 %v503, %v623
    %vm656 = vcmp.gt.f32.partialorder %v624, 0.0
    %vm657 = vcmp.gt.f32.partialorder %v625, 0.0
    %vm658 = vcmp.gt.f32.partialorder %v626, 0.0
    %vm659 = vcmp.gt.f32.partialorder %v627, 0.0
    %vm660 = vcmp.gt.f32.partialorder %v628, 0.0
    %vm661 = vcmp.gt.f32.partialorder %v629, 0.0
    %vm662 = vcmp.gt.f32.partialorder %v630, 0.0
    %vm663 = vcmp.gt.f32.partialorder %v631, 0.0
    %vm664 = vcmp.gt.f32.partialorder %v632, 0.0
    %vm665 = vcmp.gt.f32.partialorder %v633, 0.0
    %vm666 = vcmp.gt.f32.partialorder %v634, 0.0
    %vm667 = vcmp.gt.f32.partialorder %v635, 0.0
    %vm668 = vcmp.gt.f32.partialorder %v636, 0.0
    %vm669 = vcmp.gt.f32.partialorder %v637, 0.0
    %vm670 = vcmp.gt.f32.partialorder %v638, 0.0
    %vm671 = vcmp.gt.f32.partialorder %v639, 0.0
    %vm672 = vcmp.gt.f32.partialorder %v640, 0.0
    %vm673 = vcmp.gt.f32.partialorder %v641, 0.0
    %vm674 = vcmp.gt.f32.partialorder %v642, 0.0
    %vm675 = vcmp.gt.f32.partialorder %v643, 0.0
    %vm676 = vcmp.gt.f32.partialorder %v644, 0.0
    %vm677 = vcmp.gt.f32.partialorder %v645, 0.0
    %vm678 = vcmp.gt.f32.partialorder %v646, 0.0
    %vm679 = vcmp.gt.f32.partialorder %v647, 0.0
    %vm680 = vcmp.gt.f32.partialorder %v648, 0.0
    %vm681 = vcmp.gt.f32.partialorder %v649, 0.0
    %vm682 = vcmp.gt.f32.partialorder %v650, 0.0
    %vm683 = vcmp.gt.f32.partialorder %v651, 0.0
    %vm684 = vcmp.gt.f32.partialorder %v652, 0.0
    %vm685 = vcmp.gt.f32.partialorder %v653, 0.0
    %vm686 = vcmp.gt.f32.partialorder %v654, 0.0
    %vm687 = vcmp.gt.f32.partialorder %v655, 0.0
    %v688 = vmul.f32 %v624, 0.01
    %v689 = vmul.f32 %v625, 0.01
    %v690 = vmul.f32 %v626, 0.01
    %v691 = vmul.f32 %v627, 0.01
    %v692 = vmul.f32 %v628, 0.01
    %v693 = vmul.f32 %v629, 0.01
    %v694 = vmul.f32 %v630, 0.01
    %v695 = vmul.f32 %v631, 0.01
    %v696 = vmul.f32 %v632, 0.01
    %v697 = vmul.f32 %v633, 0.01
    %v698 = vmul.f32 %v634, 0.01
    %v699 = vmul.f32 %v635, 0.01
    %v700 = vmul.f32 %v636, 0.01
    %v701 = vmul.f32 %v637, 0.01
    %v702 = vmul.f32 %v638, 0.01
    %v703 = vmul.f32 %v639, 0.01
    %v704 = vmul.f32 %v640, 0.01
    %v705 = vmul.f32 %v641, 0.01
    %v706 = vmul.f32 %v642, 0.01
    %v707 = vmul.f32 %v643, 0.01
    %v708 = vmul.f32 %v644, 0.01
    %v709 = vmul.f32 %v645, 0.01
    %v710 = vmul.f32 %v646, 0.01
    %v711 = vmul.f32 %v647, 0.01
    %v712 = vmul.f32 %v648, 0.01
    %v713 = vmul.f32 %v649, 0.01
    %v714 = vmul.f32 %v650, 0.01
    %v715 = vmul.f32 %v651, 0.01
    %v716 = vmul.f32 %v652, 0.01
    %v717 = vmul.f32 %v653, 0.01
    %v718 = vmul.f32 %v654, 0.01
    %v719 = vmul.f32 %v655, 0.01
    %v720 = vsel %vm656, %v624, %v688
    %v721 = vsel %vm657, %v625, %v689
    %v722 = vsel %vm658, %v626, %v690
    %v723 = vsel %vm659, %v627, %v691
    %v724 = vsel %vm660, %v628, %v692
    %v725 = vsel %vm661, %v629, %v693
    %v726 = vsel %vm662, %v630, %v694
    %v727 = vsel %vm663, %v631, %v695
    %v728 = vsel %vm664, %v632, %v696
    %v729 = vsel %vm665, %v633, %v697
    %v730 = vsel %vm666, %v634, %v698
    %v731 = vsel %vm667, %v635, %v699
    %v732 = vsel %vm668, %v636, %v700
    %v733 = vsel %vm669, %v637, %v701
    %v734 = vsel %vm670, %v638, %v702
    %v735 = vsel %vm671, %v639, %v703
    %v736 = vsel %vm672, %v640, %v704
    %v737 = vsel %vm673, %v641, %v705
    %v738 = vsel %vm674, %v642, %v706
    %v739 = vsel %vm675, %v643, %v707
    %v740 = vsel %vm676, %v644, %v708
    %v741 = vsel %vm677, %v645, %v709
    %v742 = vsel %vm678, %v646, %v710
    %v743 = vsel %vm679, %v647, %v711
    %v744 = vsel %vm680, %v648, %v712
    %v745 = vsel %vm681, %v649, %v713
    %v746 = vsel %vm682, %v650, %v714
    %v747 = vsel %vm683, %v651, %v715
    %v748 = vsel %vm684, %v652, %v716
    %v749 = vsel %vm685, %v653, %v717
    %v750 = vsel %vm686, %v654, %v718
    %v751 = vsel %vm687, %v655, %v719
    %753 = vset.pattern.permute.xlu0 0
    %754 = vperm.xlu0 %753, %v23
    %v755 = vpop.permute.xlu0 %754
    %v757 = vlaneseq
    %v758 = vshrl.u32 %v757, 7
    %v759 = vsub.s32 0, %v758
    %v760 = vrot.slane %v720, %v759
    %v761 = vlaneseq
    %v762 = vshrl.u32 %v761, 7
    %v763 = vsub.s32 0, %v762
    %v764 = vrot.slane %v721, %v763
    %v765 = vlaneseq
    %v766 = vshrl.u32 %v765, 7
    %v767 = vsub.s32 0, %v766
    %v768 = vrot.slane %v722, %v767
    %v769 = vlaneseq
    %v770 = vshrl.u32 %v769, 7
    %v771 = vsub.s32 0, %v770
    %v772 = vrot.slane %v723, %v771
    %v773 = vlaneseq
    %v774 = vshrl.u32 %v773, 7
    %v775 = vsub.s32 0, %v774
    %v776 = vrot.slane %v724, %v775
    %v777 = vlaneseq
    %v778 = vshrl.u32 %v777, 7
    %v779 = vsub.s32 0, %v778
    %v780 = vrot.slane %v725, %v779
    %v781 = vlaneseq
    %v782 = vshrl.u32 %v781, 7
    %v783 = vsub.s32 0, %v782
    %v784 = vrot.slane %v726, %v783
    %v785 = vlaneseq
    %v786 = vshrl.u32 %v785, 7
    %v787 = vsub.s32 0, %v786
    %v788 = vrot.slane %v727, %v787
    %v789 = vmul.f32 %v755, %v760
    %v790 = vmul.f32 %v755, %v764
    %v791 = vmul.f32 %v755, %v768
    %v792 = vmul.f32 %v755, %v772
    %v793 = vmul.f32 %v755, %v776
    %v794 = vmul.f32 %v755, %v780
    %v795 = vmul.f32 %v755, %v784
    %v796 = vmul.f32 %v755, %v788
    %797 = vset.pattern.permute.xlu0 32
    %798 = vperm.xlu0 %797, %v23
    %v799 = vpop.permute.xlu0 %798
    %v801 = vadd.f32 %v799, %v789
    %v802 = vadd.f32 %v799, %v790
    %v803 = vadd.f32 %v799, %v791
    %v804 = vadd.f32 %v799, %v792
    %v805 = vadd.f32 %v799, %v793
    %v806 = vadd.f32 %v799, %v794
    %v807 = vadd.f32 %v799, %v795
    %v808 = vadd.f32 %v799, %v796
    %809 = vset.pattern.permute.xlu0 1
    %810 = vperm.xlu0 %809, %v23
    %v811 = vpop.permute.xlu0 %810
    %v813 = vlaneseq
    %v814 = vshrl.u32 %v813, 7
    %v815 = vsub.s32 1, %v814
    %v816 = vrot.slane %v720, %v815
    %v817 = vlaneseq
    %v818 = vshrl.u32 %v817, 7
    %v819 = vsub.s32 1, %v818
    %v820 = vrot.slane %v721, %v819
    %v821 = vlaneseq
    %v822 = vshrl.u32 %v821, 7
    %v823 = vsub.s32 1, %v822
    %v824 = vrot.slane %v722, %v823
    %v825 = vlaneseq
    %v826 = vshrl.u32 %v825, 7
    %v827 = vsub.s32 1, %v826
    %v828 = vrot.slane %v723, %v827
    %v829 = vlaneseq
    %v830 = vshrl.u32 %v829, 7
    %v831 = vsub.s32 1, %v830
    %v832 = vrot.slane %v724, %v831
    %v833 = vlaneseq
    %v834 = vshrl.u32 %v833, 7
    %v835 = vsub.s32 1, %v834
    %v836 = vrot.slane %v725, %v835
    %v837 = vlaneseq
    %v838 = vshrl.u32 %v837, 7
    %v839 = vsub.s32 1, %v838
    %v840 = vrot.slane %v726, %v839
    %v841 = vlaneseq
    %v842 = vshrl.u32 %v841, 7
    %v843 = vsub.s32 1, %v842
    %v844 = vrot.slane %v727, %v843
    %v845 = vmul.f32 %v811, %v816
    %v846 = vmul.f32 %v811, %v820
    %v847 = vmul.f32 %v811, %v824
    %v848 = vmul.f32 %v811, %v828
    %v849 = vmul.f32 %v811, %v832
    %v850 = vmul.f32 %v811, %v836
    %v851 = vmul.f32 %v811, %v840
    %v852 = vmul.f32 %v811, %v844
    %v853 = vadd.f32 %v801, %v845
    %v854 = vadd.f32 %v802, %v846
    %v855 = vadd.f32 %v803, %v847
    %v856 = vadd.f32 %v804, %v848
    %v857 = vadd.f32 %v805, %v849
    %v858 = vadd.f32 %v806, %v850
    %v859 = vadd.f32 %v807, %v851
    %v860 = vadd.f32 %v808, %v852
    %861 = vset.pattern.permute.xlu0 2
    %862 = vperm.xlu0 %861, %v23
    %v863 = vpop.permute.xlu0 %862
    %v865 = vlaneseq
    %v866 = vshrl.u32 %v865, 7
    %v867 = vsub.s32 2, %v866
    %v868 = vrot.slane %v720, %v867
    %v869 = vlaneseq
    %v870 = vshrl.u32 %v869, 7
    %v871 = vsub.s32 2, %v870
    %v872 = vrot.slane %v721, %v871
    %v873 = vlaneseq
    %v874 = vshrl.u32 %v873, 7
    %v875 = vsub.s32 2, %v874
    %v876 = vrot.slane %v722, %v875
    %v877 = vlaneseq
    %v878 = vshrl.u32 %v877, 7
    %v879 = vsub.s32 2, %v878
    %v880 = vrot.slane %v723, %v879
    %v881 = vlaneseq
    %v882 = vshrl.u32 %v881, 7
    %v883 = vsub.s32 2, %v882
    %v884 = vrot.slane %v724, %v883
    %v885 = vlaneseq
    %v886 = vshrl.u32 %v885, 7
    %v887 = vsub.s32 2, %v886
    %v888 = vrot.slane %v725, %v887
    %v889 = vlaneseq
    %v890 = vshrl.u32 %v889, 7
    %v891 = vsub.s32 2, %v890
    %v892 = vrot.slane %v726, %v891
    %v893 = vlaneseq
    %v894 = vshrl.u32 %v893, 7
    %v895 = vsub.s32 2, %v894
    %v896 = vrot.slane %v727, %v895
    %v897 = vmul.f32 %v863, %v868
    %v898 = vmul.f32 %v863, %v872
    %v899 = vmul.f32 %v863, %v876
    %v900 = vmul.f32 %v863, %v880
    %v901 = vmul.f32 %v863, %v884
    %v902 = vmul.f32 %v863, %v888
    %v903 = vmul.f32 %v863, %v892
    %v904 = vmul.f32 %v863, %v896
    %v905 = vadd.f32 %v853, %v897
    %v906 = vadd.f32 %v854, %v898
    %v907 = vadd.f32 %v855, %v899
    %v908 = vadd.f32 %v856, %v900
    %v909 = vadd.f32 %v857, %v901
    %v910 = vadd.f32 %v858, %v902
    %v911 = vadd.f32 %v859, %v903
    %v912 = vadd.f32 %v860, %v904
    %913 = vset.pattern.permute.xlu0 3
    %914 = vperm.xlu0 %913, %v23
    %v915 = vpop.permute.xlu0 %914
    %v917 = vlaneseq
    %v918 = vshrl.u32 %v917, 7
    %v919 = vsub.s32 3, %v918
    %v920 = vrot.slane %v720, %v919
    %v921 = vlaneseq
    %v922 = vshrl.u32 %v921, 7
    %v923 = vsub.s32 3, %v922
    %v924 = vrot.slane %v721, %v923
    %v925 = vlaneseq
    %v926 = vshrl.u32 %v925, 7
    %v927 = vsub.s32 3, %v926
    %v928 = vrot.slane %v722, %v927
    %v929 = vlaneseq
    %v930 = vshrl.u32 %v929, 7
    %v931 = vsub.s32 3, %v930
    %v932 = vrot.slane %v723, %v931
    %v933 = vlaneseq
    %v934 = vshrl.u32 %v933, 7
    %v935 = vsub.s32 3, %v934
    %v936 = vrot.slane %v724, %v935
    %v937 = vlaneseq
    %v938 = vshrl.u32 %v937, 7
    %v939 = vsub.s32 3, %v938
    %v940 = vrot.slane %v725, %v939
    %v941 = vlaneseq
    %v942 = vshrl.u32 %v941, 7
    %v943 = vsub.s32 3, %v942
    %v944 = vrot.slane %v726, %v943
    %v945 = vlaneseq
    %v946 = vshrl.u32 %v945, 7
    %v947 = vsub.s32 3, %v946
    %v948 = vrot.slane %v727, %v947
    %v949 = vmul.f32 %v915, %v920
    %v950 = vmul.f32 %v915, %v924
    %v951 = vmul.f32 %v915, %v928
    %v952 = vmul.f32 %v915, %v932
    %v953 = vmul.f32 %v915, %v936
    %v954 = vmul.f32 %v915, %v940
    %v955 = vmul.f32 %v915, %v944
    %v956 = vmul.f32 %v915, %v948
    %v957 = vadd.f32 %v905, %v949
    %v958 = vadd.f32 %v906, %v950
    %v959 = vadd.f32 %v907, %v951
    %v960 = vadd.f32 %v908, %v952
    %v961 = vadd.f32 %v909, %v953
    %v962 = vadd.f32 %v910, %v954
    %v963 = vadd.f32 %v911, %v955
    %v964 = vadd.f32 %v912, %v956
    %965 = vset.pattern.permute.xlu0 4
    %966 = vperm.xlu0 %965, %v23
    %v967 = vpop.permute.xlu0 %966
    %v969 = vlaneseq
    %v970 = vshrl.u32 %v969, 7
    %v971 = vsub.s32 4, %v970
    %v972 = vrot.slane %v720, %v971
    %v973 = vlaneseq
    %v974 = vshrl.u32 %v973, 7
    %v975 = vsub.s32 4, %v974
    %v976 = vrot.slane %v721, %v975
    %v977 = vlaneseq
    %v978 = vshrl.u32 %v977, 7
    %v979 = vsub.s32 4, %v978
    %v980 = vrot.slane %v722, %v979
    %v981 = vlaneseq
    %v982 = vshrl.u32 %v981, 7
    %v983 = vsub.s32 4, %v982
    %v984 = vrot.slane %v723, %v983
    %v985 = vlaneseq
    %v986 = vshrl.u32 %v985, 7
    %v987 = vsub.s32 4, %v986
    %v988 = vrot.slane %v724, %v987
    %v989 = vlaneseq
    %v990 = vshrl.u32 %v989, 7
    %v991 = vsub.s32 4, %v990
    %v992 = vrot.slane %v725, %v991
    %v993 = vlaneseq
    %v994 = vshrl.u32 %v993, 7
    %v995 = vsub.s32 4, %v994
    %v996 = vrot.slane %v726, %v995
    %v997 = vlaneseq
    %v998 = vshrl.u32 %v997, 7
    %v999 = vsub.s32 4, %v998
    %v1000 = vrot.slane %v727, %v999
    %v1001 = vmul.f32 %v967, %v972
    %v1002 = vmul.f32 %v967, %v976
    %v1003 = vmul.f32 %v967, %v980
    %v1004 = vmul.f32 %v967, %v984
    %v1005 = vmul.f32 %v967, %v988
    %v1006 = vmul.f32 %v967, %v992
    %v1007 = vmul.f32 %v967, %v996
    %v1008 = vmul.f32 %v967, %v1000
    %v1009 = vadd.f32 %v957, %v1001
    %v1010 = vadd.f32 %v958, %v1002
    %v1011 = vadd.f32 %v959, %v1003
    %v1012 = vadd.f32 %v960, %v1004
    %v1013 = vadd.f32 %v961, %v1005
    %v1014 = vadd.f32 %v962, %v1006
    %v1015 = vadd.f32 %v963, %v1007
    %v1016 = vadd.f32 %v964, %v1008
    %1017 = vset.pattern.permute.xlu0 5
    %1018 = vperm.xlu0 %1017, %v23
    %v1019 = vpop.permute.xlu0 %1018
    %v1021 = vlaneseq
    %v1022 = vshrl.u32 %v1021, 7
    %v1023 = vsub.s32 5, %v1022
    %v1024 = vrot.slane %v720, %v1023
    %v1025 = vlaneseq
    %v1026 = vshrl.u32 %v1025, 7
    %v1027 = vsub.s32 5, %v1026
    %v1028 = vrot.slane %v721, %v1027
    %v1029 = vlaneseq
    %v1030 = vshrl.u32 %v1029, 7
    %v1031 = vsub.s32 5, %v1030
    %v1032 = vrot.slane %v722, %v1031
    %v1033 = vlaneseq
    %v1034 = vshrl.u32 %v1033, 7
    %v1035 = vsub.s32 5, %v1034
    %v1036 = vrot.slane %v723, %v1035
    %v1037 = vlaneseq
    %v1038 = vshrl.u32 %v1037, 7
    %v1039 = vsub.s32 5, %v1038
    %v1040 = vrot.slane %v724, %v1039
    %v1041 = vlaneseq
    %v1042 = vshrl.u32 %v1041, 7
    %v1043 = vsub.s32 5, %v1042
    %v1044 = vrot.slane %v725, %v1043
    %v1045 = vlaneseq
    %v1046 = vshrl.u32 %v1045, 7
    %v1047 = vsub.s32 5, %v1046
    %v1048 = vrot.slane %v726, %v1047
    %v1049 = vlaneseq
    %v1050 = vshrl.u32 %v1049, 7
    %v1051 = vsub.s32 5, %v1050
    %v1052 = vrot.slane %v727, %v1051
    %v1053 = vmul.f32 %v1019, %v1024
    %v1054 = vmul.f32 %v1019, %v1028
    %v1055 = vmul.f32 %v1019, %v1032
    %v1056 = vmul.f32 %v1019, %v1036
    %v1057 = vmul.f32 %v1019, %v1040
    %v1058 = vmul.f32 %v1019, %v1044
    %v1059 = vmul.f32 %v1019, %v1048
    %v1060 = vmul.f32 %v1019, %v1052
    %v1061 = vadd.f32 %v1009, %v1053
    %v1062 = vadd.f32 %v1010, %v1054
    %v1063 = vadd.f32 %v1011, %v1055
    %v1064 = vadd.f32 %v1012, %v1056
    %v1065 = vadd.f32 %v1013, %v1057
    %v1066 = vadd.f32 %v1014, %v1058
    %v1067 = vadd.f32 %v1015, %v1059
    %v1068 = vadd.f32 %v1016, %v1060
    %1069 = vset.pattern.permute.xlu0 6
    %1070 = vperm.xlu0 %1069, %v23
    %v1071 = vpop.permute.xlu0 %1070
    %v1073 = vlaneseq
    %v1074 = vshrl.u32 %v1073, 7
    %v1075 = vsub.s32 6, %v1074
    %v1076 = vrot.slane %v720, %v1075
    %v1077 = vlaneseq
    %v1078 = vshrl.u32 %v1077, 7
    %v1079 = vsub.s32 6, %v1078
    %v1080 = vrot.slane %v721, %v1079
    %v1081 = vlaneseq
    %v1082 = vshrl.u32 %v1081, 7
    %v1083 = vsub.s32 6, %v1082
    %v1084 = vrot.slane %v722, %v1083
    %v1085 = vlaneseq
    %v1086 = vshrl.u32 %v1085, 7
    %v1087 = vsub.s32 6, %v1086
    %v1088 = vrot.slane %v723, %v1087
    %v1089 = vlaneseq
    %v1090 = vshrl.u32 %v1089, 7
    %v1091 = vsub.s32 6, %v1090
    %v1092 = vrot.slane %v724, %v1091
    %v1093 = vlaneseq
    %v1094 = vshrl.u32 %v1093, 7
    %v1095 = vsub.s32 6, %v1094
    %v1096 = vrot.slane %v725, %v1095
    %v1097 = vlaneseq
    %v1098 = vshrl.u32 %v1097, 7
    %v1099 = vsub.s32 6, %v1098
    %v1100 = vrot.slane %v726, %v1099
    %v1101 = vlaneseq
    %v1102 = vshrl.u32 %v1101, 7
    %v1103 = vsub.s32 6, %v1102
    %v1104 = vrot.slane %v727, %v1103
    %v1105 = vmul.f32 %v1071, %v1076
    %v1106 = vmul.f32 %v1071, %v1080
    %v1107 = vmul.f32 %v1071, %v1084
    %v1108 = vmul.f32 %v1071, %v1088
    %v1109 = vmul.f32 %v1071, %v1092
    %v1110 = vmul.f32 %v1071, %v1096
    %v1111 = vmul.f32 %v1071, %v1100
    %v1112 = vmul.f32 %v1071, %v1104
    %v1113 = vadd.f32 %v1061, %v1105
    %v1114 = vadd.f32 %v1062, %v1106
    %v1115 = vadd.f32 %v1063, %v1107
    %v1116 = vadd.f32 %v1064, %v1108
    %v1117 = vadd.f32 %v1065, %v1109
    %v1118 = vadd.f32 %v1066, %v1110
    %v1119 = vadd.f32 %v1067, %v1111
    %v1120 = vadd.f32 %v1068, %v1112
    %1121 = vset.pattern.permute.xlu0 7
    %1122 = vperm.xlu0 %1121, %v23
    %v1123 = vpop.permute.xlu0 %1122
    %v1125 = vlaneseq
    %v1126 = vshrl.u32 %v1125, 7
    %v1127 = vsub.s32 7, %v1126
    %v1128 = vrot.slane %v720, %v1127
    %v1129 = vlaneseq
    %v1130 = vshrl.u32 %v1129, 7
    %v1131 = vsub.s32 7, %v1130
    %v1132 = vrot.slane %v721, %v1131
    %v1133 = vlaneseq
    %v1134 = vshrl.u32 %v1133, 7
    %v1135 = vsub.s32 7, %v1134
    %v1136 = vrot.slane %v722, %v1135
    %v1137 = vlaneseq
    %v1138 = vshrl.u32 %v1137, 7
    %v1139 = vsub.s32 7, %v1138
    %v1140 = vrot.slane %v723, %v1139
    %v1141 = vlaneseq
    %v1142 = vshrl.u32 %v1141, 7
    %v1143 = vsub.s32 7, %v1142
    %v1144 = vrot.slane %v724, %v1143
    %v1145 = vlaneseq
    %v1146 = vshrl.u32 %v1145, 7
    %v1147 = vsub.s32 7, %v1146
    %v1148 = vrot.slane %v725, %v1147
    %v1149 = vlaneseq
    %v1150 = vshrl.u32 %v1149, 7
    %v1151 = vsub.s32 7, %v1150
    %v1152 = vrot.slane %v726, %v1151
    %v1153 = vlaneseq
    %v1154 = vshrl.u32 %v1153, 7
    %v1155 = vsub.s32 7, %v1154
    %v1156 = vrot.slane %v727, %v1155
    %v1157 = vmul.f32 %v1123, %v1128
    %v1158 = vmul.f32 %v1123, %v1132
    %v1159 = vmul.f32 %v1123, %v1136
    %v1160 = vmul.f32 %v1123, %v1140
    %v1161 = vmul.f32 %v1123, %v1144
    %v1162 = vmul.f32 %v1123, %v1148
    %v1163 = vmul.f32 %v1123, %v1152
    %v1164 = vmul.f32 %v1123, %v1156
    %v1165 = vadd.f32 %v1113, %v1157
    %v1166 = vadd.f32 %v1114, %v1158
    %v1167 = vadd.f32 %v1115, %v1159
    %v1168 = vadd.f32 %v1116, %v1160
    %v1169 = vadd.f32 %v1117, %v1161
    %v1170 = vadd.f32 %v1118, %v1162
    %v1171 = vadd.f32 %v1119, %v1163
    %v1172 = vadd.f32 %v1120, %v1164
    %1173 = vset.pattern.permute.xlu0 8
    %1174 = vperm.xlu0 %1173, %v23
    %v1175 = vpop.permute.xlu0 %1174
    %v1177 = vlaneseq
    %v1178 = vshrl.u32 %v1177, 7
    %v1179 = vsub.s32 0, %v1178
    %v1180 = vrot.slane %v728, %v1179
    %v1181 = vlaneseq
    %v1182 = vshrl.u32 %v1181, 7
    %v1183 = vsub.s32 0, %v1182
    %v1184 = vrot.slane %v729, %v1183
    %v1185 = vlaneseq
    %v1186 = vshrl.u32 %v1185, 7
    %v1187 = vsub.s32 0, %v1186
    %v1188 = vrot.slane %v730, %v1187
    %v1189 = vlaneseq
    %v1190 = vshrl.u32 %v1189, 7
    %v1191 = vsub.s32 0, %v1190
    %v1192 = vrot.slane %v731, %v1191
    %v1193 = vlaneseq
    %v1194 = vshrl.u32 %v1193, 7
    %v1195 = vsub.s32 0, %v1194
    %v1196 = vrot.slane %v732, %v1195
    %v1197 = vlaneseq
    %v1198 = vshrl.u32 %v1197, 7
    %v1199 = vsub.s32 0, %v1198
    %v1200 = vrot.slane %v733, %v1199
    %v1201 = vlaneseq
    %v1202 = vshrl.u32 %v1201, 7
    %v1203 = vsub.s32 0, %v1202
    %v1204 = vrot.slane %v734, %v1203
    %v1205 = vlaneseq
    %v1206 = vshrl.u32 %v1205, 7
    %v1207 = vsub.s32 0, %v1206
    %v1208 = vrot.slane %v735, %v1207
    %v1209 = vmul.f32 %v1175, %v1180
    %v1210 = vmul.f32 %v1175, %v1184
    %v1211 = vmul.f32 %v1175, %v1188
    %v1212 = vmul.f32 %v1175, %v1192
    %v1213 = vmul.f32 %v1175, %v1196
    %v1214 = vmul.f32 %v1175, %v1200
    %v1215 = vmul.f32 %v1175, %v1204
    %v1216 = vmul.f32 %v1175, %v1208
    %v1217 = vadd.f32 %v1165, %v1209
    %v1218 = vadd.f32 %v1166, %v1210
    %v1219 = vadd.f32 %v1167, %v1211
    %v1220 = vadd.f32 %v1168, %v1212
    %v1221 = vadd.f32 %v1169, %v1213
    %v1222 = vadd.f32 %v1170, %v1214
    %v1223 = vadd.f32 %v1171, %v1215
    %v1224 = vadd.f32 %v1172, %v1216
    %1225 = vset.pattern.permute.xlu0 9
    %1226 = vperm.xlu0 %1225, %v23
    %v1227 = vpop.permute.xlu0 %1226
    %v1229 = vlaneseq
    %v1230 = vshrl.u32 %v1229, 7
    %v1231 = vsub.s32 1, %v1230
    %v1232 = vrot.slane %v728, %v1231
    %v1233 = vlaneseq
    %v1234 = vshrl.u32 %v1233, 7
    %v1235 = vsub.s32 1, %v1234
    %v1236 = vrot.slane %v729, %v1235
    %v1237 = vlaneseq
    %v1238 = vshrl.u32 %v1237, 7
    %v1239 = vsub.s32 1, %v1238
    %v1240 = vrot.slane %v730, %v1239
    %v1241 = vlaneseq
    %v1242 = vshrl.u32 %v1241, 7
    %v1243 = vsub.s32 1, %v1242
    %v1244 = vrot.slane %v731, %v1243
    %v1245 = vlaneseq
    %v1246 = vshrl.u32 %v1245, 7
    %v1247 = vsub.s32 1, %v1246
    %v1248 = vrot.slane %v732, %v1247
    %v1249 = vlaneseq
    %v1250 = vshrl.u32 %v1249, 7
    %v1251 = vsub.s32 1, %v1250
    %v1252 = vrot.slane %v733, %v1251
    %v1253 = vlaneseq
    %v1254 = vshrl.u32 %v1253, 7
    %v1255 = vsub.s32 1, %v1254
    %v1256 = vrot.slane %v734, %v1255
    %v1257 = vlaneseq
    %v1258 = vshrl.u32 %v1257, 7
    %v1259 = vsub.s32 1, %v1258
    %v1260 = vrot.slane %v735, %v1259
    %v1261 = vmul.f32 %v1227, %v1232
    %v1262 = vmul.f32 %v1227, %v1236
    %v1263 = vmul.f32 %v1227, %v1240
    %v1264 = vmul.f32 %v1227, %v1244
    %v1265 = vmul.f32 %v1227, %v1248
    %v1266 = vmul.f32 %v1227, %v1252
    %v1267 = vmul.f32 %v1227, %v1256
    %v1268 = vmul.f32 %v1227, %v1260
    %v1269 = vadd.f32 %v1217, %v1261
    %v1270 = vadd.f32 %v1218, %v1262
    %v1271 = vadd.f32 %v1219, %v1263
    %v1272 = vadd.f32 %v1220, %v1264
    %v1273 = vadd.f32 %v1221, %v1265
    %v1274 = vadd.f32 %v1222, %v1266
    %v1275 = vadd.f32 %v1223, %v1267
    %v1276 = vadd.f32 %v1224, %v1268
    %1277 = vset.pattern.permute.xlu0 10
    %1278 = vperm.xlu0 %1277, %v23
    %v1279 = vpop.permute.xlu0 %1278
    %v1281 = vlaneseq
    %v1282 = vshrl.u32 %v1281, 7
    %v1283 = vsub.s32 2, %v1282
    %v1284 = vrot.slane %v728, %v1283
    %v1285 = vlaneseq
    %v1286 = vshrl.u32 %v1285, 7
    %v1287 = vsub.s32 2, %v1286
    %v1288 = vrot.slane %v729, %v1287
    %v1289 = vlaneseq
    %v1290 = vshrl.u32 %v1289, 7
    %v1291 = vsub.s32 2, %v1290
    %v1292 = vrot.slane %v730, %v1291
    %v1293 = vlaneseq
    %v1294 = vshrl.u32 %v1293, 7
    %v1295 = vsub.s32 2, %v1294
    %v1296 = vrot.slane %v731, %v1295
    %v1297 = vlaneseq
    %v1298 = vshrl.u32 %v1297, 7
    %v1299 = vsub.s32 2, %v1298
    %v1300 = vrot.slane %v732, %v1299
    %v1301 = vlaneseq
    %v1302 = vshrl.u32 %v1301, 7
    %v1303 = vsub.s32 2, %v1302
    %v1304 = vrot.slane %v733, %v1303
    %v1305 = vlaneseq
    %v1306 = vshrl.u32 %v1305, 7
    %v1307 = vsub.s32 2, %v1306
    %v1308 = vrot.slane %v734, %v1307
    %v1309 = vlaneseq
    %v1310 = vshrl.u32 %v1309, 7
    %v1311 = vsub.s32 2, %v1310
    %v1312 = vrot.slane %v735, %v1311
    %v1313 = vmul.f32 %v1279, %v1284
    %v1314 = vmul.f32 %v1279, %v1288
    %v1315 = vmul.f32 %v1279, %v1292
    %v1316 = vmul.f32 %v1279, %v1296
    %v1317 = vmul.f32 %v1279, %v1300
    %v1318 = vmul.f32 %v1279, %v1304
    %v1319 = vmul.f32 %v1279, %v1308
    %v1320 = vmul.f32 %v1279, %v1312
    %v1321 = vadd.f32 %v1269, %v1313
    %v1322 = vadd.f32 %v1270, %v1314
    %v1323 = vadd.f32 %v1271, %v1315
    %v1324 = vadd.f32 %v1272, %v1316
    %v1325 = vadd.f32 %v1273, %v1317
    %v1326 = vadd.f32 %v1274, %v1318
    %v1327 = vadd.f32 %v1275, %v1319
    %v1328 = vadd.f32 %v1276, %v1320
    %1329 = vset.pattern.permute.xlu0 11
    %1330 = vperm.xlu0 %1329, %v23
    %v1331 = vpop.permute.xlu0 %1330
    %v1333 = vlaneseq
    %v1334 = vshrl.u32 %v1333, 7
    %v1335 = vsub.s32 3, %v1334
    %v1336 = vrot.slane %v728, %v1335
    %v1337 = vlaneseq
    %v1338 = vshrl.u32 %v1337, 7
    %v1339 = vsub.s32 3, %v1338
    %v1340 = vrot.slane %v729, %v1339
    %v1341 = vlaneseq
    %v1342 = vshrl.u32 %v1341, 7
    %v1343 = vsub.s32 3, %v1342
    %v1344 = vrot.slane %v730, %v1343
    %v1345 = vlaneseq
    %v1346 = vshrl.u32 %v1345, 7
    %v1347 = vsub.s32 3, %v1346
    %v1348 = vrot.slane %v731, %v1347
    %v1349 = vlaneseq
    %v1350 = vshrl.u32 %v1349, 7
    %v1351 = vsub.s32 3, %v1350
    %v1352 = vrot.slane %v732, %v1351
    %v1353 = vlaneseq
    %v1354 = vshrl.u32 %v1353, 7
    %v1355 = vsub.s32 3, %v1354
    %v1356 = vrot.slane %v733, %v1355
    %v1357 = vlaneseq
    %v1358 = vshrl.u32 %v1357, 7
    %v1359 = vsub.s32 3, %v1358
    %v1360 = vrot.slane %v734, %v1359
    %v1361 = vlaneseq
    %v1362 = vshrl.u32 %v1361, 7
    %v1363 = vsub.s32 3, %v1362
    %v1364 = vrot.slane %v735, %v1363
    %v1365 = vmul.f32 %v1331, %v1336
    %v1366 = vmul.f32 %v1331, %v1340
    %v1367 = vmul.f32 %v1331, %v1344
    %v1368 = vmul.f32 %v1331, %v1348
    %v1369 = vmul.f32 %v1331, %v1352
    %v1370 = vmul.f32 %v1331, %v1356
    %v1371 = vmul.f32 %v1331, %v1360
    %v1372 = vmul.f32 %v1331, %v1364
    %v1373 = vadd.f32 %v1321, %v1365
    %v1374 = vadd.f32 %v1322, %v1366
    %v1375 = vadd.f32 %v1323, %v1367
    %v1376 = vadd.f32 %v1324, %v1368
    %v1377 = vadd.f32 %v1325, %v1369
    %v1378 = vadd.f32 %v1326, %v1370
    %v1379 = vadd.f32 %v1327, %v1371
    %v1380 = vadd.f32 %v1328, %v1372
    %1381 = vset.pattern.permute.xlu0 12
    %1382 = vperm.xlu0 %1381, %v23
    %v1383 = vpop.permute.xlu0 %1382
    %v1385 = vlaneseq
    %v1386 = vshrl.u32 %v1385, 7
    %v1387 = vsub.s32 4, %v1386
    %v1388 = vrot.slane %v728, %v1387
    %v1389 = vlaneseq
    %v1390 = vshrl.u32 %v1389, 7
    %v1391 = vsub.s32 4, %v1390
    %v1392 = vrot.slane %v729, %v1391
    %v1393 = vlaneseq
    %v1394 = vshrl.u32 %v1393, 7
    %v1395 = vsub.s32 4, %v1394
    %v1396 = vrot.slane %v730, %v1395
    %v1397 = vlaneseq
    %v1398 = vshrl.u32 %v1397, 7
    %v1399 = vsub.s32 4, %v1398
    %v1400 = vrot.slane %v731, %v1399
    %v1401 = vlaneseq
    %v1402 = vshrl.u32 %v1401, 7
    %v1403 = vsub.s32 4, %v1402
    %v1404 = vrot.slane %v732, %v1403
    %v1405 = vlaneseq
    %v1406 = vshrl.u32 %v1405, 7
    %v1407 = vsub.s32 4, %v1406
    %v1408 = vrot.slane %v733, %v1407
    %v1409 = vlaneseq
    %v1410 = vshrl.u32 %v1409, 7
    %v1411 = vsub.s32 4, %v1410
    %v1412 = vrot.slane %v734, %v1411
    %v1413 = vlaneseq
    %v1414 = vshrl.u32 %v1413, 7
    %v1415 = vsub.s32 4, %v1414
    %v1416 = vrot.slane %v735, %v1415
    %v1417 = vmul.f32 %v1383, %v1388
    %v1418 = vmul.f32 %v1383, %v1392
    %v1419 = vmul.f32 %v1383, %v1396
    %v1420 = vmul.f32 %v1383, %v1400
    %v1421 = vmul.f32 %v1383, %v1404
    %v1422 = vmul.f32 %v1383, %v1408
    %v1423 = vmul.f32 %v1383, %v1412
    %v1424 = vmul.f32 %v1383, %v1416
    %v1425 = vadd.f32 %v1373, %v1417
    %v1426 = vadd.f32 %v1374, %v1418
    %v1427 = vadd.f32 %v1375, %v1419
    %v1428 = vadd.f32 %v1376, %v1420
    %v1429 = vadd.f32 %v1377, %v1421
    %v1430 = vadd.f32 %v1378, %v1422
    %v1431 = vadd.f32 %v1379, %v1423
    %v1432 = vadd.f32 %v1380, %v1424
    %1433 = vset.pattern.permute.xlu0 13
    %1434 = vperm.xlu0 %1433, %v23
    %v1435 = vpop.permute.xlu0 %1434
    %v1437 = vlaneseq
    %v1438 = vshrl.u32 %v1437, 7
    %v1439 = vsub.s32 5, %v1438
    %v1440 = vrot.slane %v728, %v1439
    %v1441 = vlaneseq
    %v1442 = vshrl.u32 %v1441, 7
    %v1443 = vsub.s32 5, %v1442
    %v1444 = vrot.slane %v729, %v1443
    %v1445 = vlaneseq
    %v1446 = vshrl.u32 %v1445, 7
    %v1447 = vsub.s32 5, %v1446
    %v1448 = vrot.slane %v730, %v1447
    %v1449 = vlaneseq
    %v1450 = vshrl.u32 %v1449, 7
    %v1451 = vsub.s32 5, %v1450
    %v1452 = vrot.slane %v731, %v1451
    %v1453 = vlaneseq
    %v1454 = vshrl.u32 %v1453, 7
    %v1455 = vsub.s32 5, %v1454
    %v1456 = vrot.slane %v732, %v1455
    %v1457 = vlaneseq
    %v1458 = vshrl.u32 %v1457, 7
    %v1459 = vsub.s32 5, %v1458
    %v1460 = vrot.slane %v733, %v1459
    %v1461 = vlaneseq
    %v1462 = vshrl.u32 %v1461, 7
    %v1463 = vsub.s32 5, %v1462
    %v1464 = vrot.slane %v734, %v1463
    %v1465 = vlaneseq
    %v1466 = vshrl.u32 %v1465, 7
    %v1467 = vsub.s32 5, %v1466
    %v1468 = vrot.slane %v735, %v1467
    %v1469 = vmul.f32 %v1435, %v1440
    %v1470 = vmul.f32 %v1435, %v1444
    %v1471 = vmul.f32 %v1435, %v1448
    %v1472 = vmul.f32 %v1435, %v1452
    %v1473 = vmul.f32 %v1435, %v1456
    %v1474 = vmul.f32 %v1435, %v1460
    %v1475 = vmul.f32 %v1435, %v1464
    %v1476 = vmul.f32 %v1435, %v1468
    %v1477 = vadd.f32 %v1425, %v1469
    %v1478 = vadd.f32 %v1426, %v1470
    %v1479 = vadd.f32 %v1427, %v1471
    %v1480 = vadd.f32 %v1428, %v1472
    %v1481 = vadd.f32 %v1429, %v1473
    %v1482 = vadd.f32 %v1430, %v1474
    %v1483 = vadd.f32 %v1431, %v1475
    %v1484 = vadd.f32 %v1432, %v1476
    %1485 = vset.pattern.permute.xlu0 14
    %1486 = vperm.xlu0 %1485, %v23
    %v1487 = vpop.permute.xlu0 %1486
    %v1489 = vlaneseq
    %v1490 = vshrl.u32 %v1489, 7
    %v1491 = vsub.s32 6, %v1490
    %v1492 = vrot.slane %v728, %v1491
    %v1493 = vlaneseq
    %v1494 = vshrl.u32 %v1493, 7
    %v1495 = vsub.s32 6, %v1494
    %v1496 = vrot.slane %v729, %v1495
    %v1497 = vlaneseq
    %v1498 = vshrl.u32 %v1497, 7
    %v1499 = vsub.s32 6, %v1498
    %v1500 = vrot.slane %v730, %v1499
    %v1501 = vlaneseq
    %v1502 = vshrl.u32 %v1501, 7
    %v1503 = vsub.s32 6, %v1502
    %v1504 = vrot.slane %v731, %v1503
    %v1505 = vlaneseq
    %v1506 = vshrl.u32 %v1505, 7
    %v1507 = vsub.s32 6, %v1506
    %v1508 = vrot.slane %v732, %v1507
    %v1509 = vlaneseq
    %v1510 = vshrl.u32 %v1509, 7
    %v1511 = vsub.s32 6, %v1510
    %v1512 = vrot.slane %v733, %v1511
    %v1513 = vlaneseq
    %v1514 = vshrl.u32 %v1513, 7
    %v1515 = vsub.s32 6, %v1514
    %v1516 = vrot.slane %v734, %v1515
    %v1517 = vlaneseq
    %v1518 = vshrl.u32 %v1517, 7
    %v1519 = vsub.s32 6, %v1518
    %v1520 = vrot.slane %v735, %v1519
    %v1521 = vmul.f32 %v1487, %v1492
    %v1522 = vmul.f32 %v1487, %v1496
    %v1523 = vmul.f32 %v1487, %v1500
    %v1524 = vmul.f32 %v1487, %v1504
    %v1525 = vmul.f32 %v1487, %v1508
    %v1526 = vmul.f32 %v1487, %v1512
    %v1527 = vmul.f32 %v1487, %v1516
    %v1528 = vmul.f32 %v1487, %v1520
    %v1529 = vadd.f32 %v1477, %v1521
    %v1530 = vadd.f32 %v1478, %v1522
    %v1531 = vadd.f32 %v1479, %v1523
    %v1532 = vadd.f32 %v1480, %v1524
    %v1533 = vadd.f32 %v1481, %v1525
    %v1534 = vadd.f32 %v1482, %v1526
    %v1535 = vadd.f32 %v1483, %v1527
    %v1536 = vadd.f32 %v1484, %v1528
    %1537 = vset.pattern.permute.xlu0 15
    %1538 = vperm.xlu0 %1537, %v23
    %v1539 = vpop.permute.xlu0 %1538
    %v1541 = vlaneseq
    %v1542 = vshrl.u32 %v1541, 7
    %v1543 = vsub.s32 7, %v1542
    %v1544 = vrot.slane %v728, %v1543
    %v1545 = vlaneseq
    %v1546 = vshrl.u32 %v1545, 7
    %v1547 = vsub.s32 7, %v1546
    %v1548 = vrot.slane %v729, %v1547
    %v1549 = vlaneseq
    %v1550 = vshrl.u32 %v1549, 7
    %v1551 = vsub.s32 7, %v1550
    %v1552 = vrot.slane %v730, %v1551
    %v1553 = vlaneseq
    %v1554 = vshrl.u32 %v1553, 7
    %v1555 = vsub.s32 7, %v1554
    %v1556 = vrot.slane %v731, %v1555
    %v1557 = vlaneseq
    %v1558 = vshrl.u32 %v1557, 7
    %v1559 = vsub.s32 7, %v1558
    %v1560 = vrot.slane %v732, %v1559
    %v1561 = vlaneseq
    %v1562 = vshrl.u32 %v1561, 7
    %v1563 = vsub.s32 7, %v1562
    %v1564 = vrot.slane %v733, %v1563
    %v1565 = vlaneseq
    %v1566 = vshrl.u32 %v1565, 7
    %v1567 = vsub.s32 7, %v1566
    %v1568 = vrot.slane %v734, %v1567
    %v1569 = vlaneseq
    %v1570 = vshrl.u32 %v1569, 7
    %v1571 = vsub.s32 7, %v1570
    %v1572 = vrot.slane %v735, %v1571
    %v1573 = vmul.f32 %v1539, %v1544
    %v1574 = vmul.f32 %v1539, %v1548
    %v1575 = vmul.f32 %v1539, %v1552
    %v1576 = vmul.f32 %v1539, %v1556
    %v1577 = vmul.f32 %v1539, %v1560
    %v1578 = vmul.f32 %v1539, %v1564
    %v1579 = vmul.f32 %v1539, %v1568
    %v1580 = vmul.f32 %v1539, %v1572
    %v1581 = vadd.f32 %v1529, %v1573
    %v1582 = vadd.f32 %v1530, %v1574
    %v1583 = vadd.f32 %v1531, %v1575
    %v1584 = vadd.f32 %v1532, %v1576
    %v1585 = vadd.f32 %v1533, %v1577
    %v1586 = vadd.f32 %v1534, %v1578
    %v1587 = vadd.f32 %v1535, %v1579
    %v1588 = vadd.f32 %v1536, %v1580
    %1589 = vset.pattern.permute.xlu0 16
    %1590 = vperm.xlu0 %1589, %v23
    %v1591 = vpop.permute.xlu0 %1590
    %v1593 = vlaneseq
    %v1594 = vshrl.u32 %v1593, 7
    %v1595 = vsub.s32 0, %v1594
    %v1596 = vrot.slane %v736, %v1595
    %v1597 = vlaneseq
    %v1598 = vshrl.u32 %v1597, 7
    %v1599 = vsub.s32 0, %v1598
    %v1600 = vrot.slane %v737, %v1599
    %v1601 = vlaneseq
    %v1602 = vshrl.u32 %v1601, 7
    %v1603 = vsub.s32 0, %v1602
    %v1604 = vrot.slane %v738, %v1603
    %v1605 = vlaneseq
    %v1606 = vshrl.u32 %v1605, 7
    %v1607 = vsub.s32 0, %v1606
    %v1608 = vrot.slane %v739, %v1607
    %v1609 = vlaneseq
    %v1610 = vshrl.u32 %v1609, 7
    %v1611 = vsub.s32 0, %v1610
    %v1612 = vrot.slane %v740, %v1611
    %v1613 = vlaneseq
    %v1614 = vshrl.u32 %v1613, 7
    %v1615 = vsub.s32 0, %v1614
    %v1616 = vrot.slane %v741, %v1615
    %v1617 = vlaneseq
    %v1618 = vshrl.u32 %v1617, 7
    %v1619 = vsub.s32 0, %v1618
    %v1620 = vrot.slane %v742, %v1619
    %v1621 = vlaneseq
    %v1622 = vshrl.u32 %v1621, 7
    %v1623 = vsub.s32 0, %v1622
    %v1624 = vrot.slane %v743, %v1623
    %v1625 = vmul.f32 %v1591, %v1596
    %v1626 = vmul.f32 %v1591, %v1600
    %v1627 = vmul.f32 %v1591, %v1604
    %v1628 = vmul.f32 %v1591, %v1608
    %v1629 = vmul.f32 %v1591, %v1612
    %v1630 = vmul.f32 %v1591, %v1616
    %v1631 = vmul.f32 %v1591, %v1620
    %v1632 = vmul.f32 %v1591, %v1624
    %v1633 = vadd.f32 %v1581, %v1625
    %v1634 = vadd.f32 %v1582, %v1626
    %v1635 = vadd.f32 %v1583, %v1627
    %v1636 = vadd.f32 %v1584, %v1628
    %v1637 = vadd.f32 %v1585, %v1629
    %v1638 = vadd.f32 %v1586, %v1630
    %v1639 = vadd.f32 %v1587, %v1631
    %v1640 = vadd.f32 %v1588, %v1632
    %1641 = vset.pattern.permute.xlu0 17
    %1642 = vperm.xlu0 %1641, %v23
    %v1643 = vpop.permute.xlu0 %1642
    %v1645 = vlaneseq
    %v1646 = vshrl.u32 %v1645, 7
    %v1647 = vsub.s32 1, %v1646
    %v1648 = vrot.slane %v736, %v1647
    %v1649 = vlaneseq
    %v1650 = vshrl.u32 %v1649, 7
    %v1651 = vsub.s32 1, %v1650
    %v1652 = vrot.slane %v737, %v1651
    %v1653 = vlaneseq
    %v1654 = vshrl.u32 %v1653, 7
    %v1655 = vsub.s32 1, %v1654
    %v1656 = vrot.slane %v738, %v1655
    %v1657 = vlaneseq
    %v1658 = vshrl.u32 %v1657, 7
    %v1659 = vsub.s32 1, %v1658
    %v1660 = vrot.slane %v739, %v1659
    %v1661 = vlaneseq
    %v1662 = vshrl.u32 %v1661, 7
    %v1663 = vsub.s32 1, %v1662
    %v1664 = vrot.slane %v740, %v1663
    %v1665 = vlaneseq
    %v1666 = vshrl.u32 %v1665, 7
    %v1667 = vsub.s32 1, %v1666
    %v1668 = vrot.slane %v741, %v1667
    %v1669 = vlaneseq
    %v1670 = vshrl.u32 %v1669, 7
    %v1671 = vsub.s32 1, %v1670
    %v1672 = vrot.slane %v742, %v1671
    %v1673 = vlaneseq
    %v1674 = vshrl.u32 %v1673, 7
    %v1675 = vsub.s32 1, %v1674
    %v1676 = vrot.slane %v743, %v1675
    %v1677 = vmul.f32 %v1643, %v1648
    %v1678 = vmul.f32 %v1643, %v1652
    %v1679 = vmul.f32 %v1643, %v1656
    %v1680 = vmul.f32 %v1643, %v1660
    %v1681 = vmul.f32 %v1643, %v1664
    %v1682 = vmul.f32 %v1643, %v1668
    %v1683 = vmul.f32 %v1643, %v1672
    %v1684 = vmul.f32 %v1643, %v1676
    %v1685 = vadd.f32 %v1633, %v1677
    %v1686 = vadd.f32 %v1634, %v1678
    %v1687 = vadd.f32 %v1635, %v1679
    %v1688 = vadd.f32 %v1636, %v1680
    %v1689 = vadd.f32 %v1637, %v1681
    %v1690 = vadd.f32 %v1638, %v1682
    %v1691 = vadd.f32 %v1639, %v1683
    %v1692 = vadd.f32 %v1640, %v1684
    %1693 = vset.pattern.permute.xlu0 18
    %1694 = vperm.xlu0 %1693, %v23
    %v1695 = vpop.permute.xlu0 %1694
    %v1697 = vlaneseq
    %v1698 = vshrl.u32 %v1697, 7
    %v1699 = vsub.s32 2, %v1698
    %v1700 = vrot.slane %v736, %v1699
    %v1701 = vlaneseq
    %v1702 = vshrl.u32 %v1701, 7
    %v1703 = vsub.s32 2, %v1702
    %v1704 = vrot.slane %v737, %v1703
    %v1705 = vlaneseq
    %v1706 = vshrl.u32 %v1705, 7
    %v1707 = vsub.s32 2, %v1706
    %v1708 = vrot.slane %v738, %v1707
    %v1709 = vlaneseq
    %v1710 = vshrl.u32 %v1709, 7
    %v1711 = vsub.s32 2, %v1710
    %v1712 = vrot.slane %v739, %v1711
    %v1713 = vlaneseq
    %v1714 = vshrl.u32 %v1713, 7
    %v1715 = vsub.s32 2, %v1714
    %v1716 = vrot.slane %v740, %v1715
    %v1717 = vlaneseq
    %v1718 = vshrl.u32 %v1717, 7
    %v1719 = vsub.s32 2, %v1718
    %v1720 = vrot.slane %v741, %v1719
    %v1721 = vlaneseq
    %v1722 = vshrl.u32 %v1721, 7
    %v1723 = vsub.s32 2, %v1722
    %v1724 = vrot.slane %v742, %v1723
    %v1725 = vlaneseq
    %v1726 = vshrl.u32 %v1725, 7
    %v1727 = vsub.s32 2, %v1726
    %v1728 = vrot.slane %v743, %v1727
    %v1729 = vmul.f32 %v1695, %v1700
    %v1730 = vmul.f32 %v1695, %v1704
    %v1731 = vmul.f32 %v1695, %v1708
    %v1732 = vmul.f32 %v1695, %v1712
    %v1733 = vmul.f32 %v1695, %v1716
    %v1734 = vmul.f32 %v1695, %v1720
    %v1735 = vmul.f32 %v1695, %v1724
    %v1736 = vmul.f32 %v1695, %v1728
    %v1737 = vadd.f32 %v1685, %v1729
    %v1738 = vadd.f32 %v1686, %v1730
    %v1739 = vadd.f32 %v1687, %v1731
    %v1740 = vadd.f32 %v1688, %v1732
    %v1741 = vadd.f32 %v1689, %v1733
    %v1742 = vadd.f32 %v1690, %v1734
    %v1743 = vadd.f32 %v1691, %v1735
    %v1744 = vadd.f32 %v1692, %v1736
    %1745 = vset.pattern.permute.xlu0 19
    %1746 = vperm.xlu0 %1745, %v23
    %v1747 = vpop.permute.xlu0 %1746
    %v1749 = vlaneseq
    %v1750 = vshrl.u32 %v1749, 7
    %v1751 = vsub.s32 3, %v1750
    %v1752 = vrot.slane %v736, %v1751
    %v1753 = vlaneseq
    %v1754 = vshrl.u32 %v1753, 7
    %v1755 = vsub.s32 3, %v1754
    %v1756 = vrot.slane %v737, %v1755
    %v1757 = vlaneseq
    %v1758 = vshrl.u32 %v1757, 7
    %v1759 = vsub.s32 3, %v1758
    %v1760 = vrot.slane %v738, %v1759
    %v1761 = vlaneseq
    %v1762 = vshrl.u32 %v1761, 7
    %v1763 = vsub.s32 3, %v1762
    %v1764 = vrot.slane %v739, %v1763
    %v1765 = vlaneseq
    %v1766 = vshrl.u32 %v1765, 7
    %v1767 = vsub.s32 3, %v1766
    %v1768 = vrot.slane %v740, %v1767
    %v1769 = vlaneseq
    %v1770 = vshrl.u32 %v1769, 7
    %v1771 = vsub.s32 3, %v1770
    %v1772 = vrot.slane %v741, %v1771
    %v1773 = vlaneseq
    %v1774 = vshrl.u32 %v1773, 7
    %v1775 = vsub.s32 3, %v1774
    %v1776 = vrot.slane %v742, %v1775
    %v1777 = vlaneseq
    %v1778 = vshrl.u32 %v1777, 7
    %v1779 = vsub.s32 3, %v1778
    %v1780 = vrot.slane %v743, %v1779
    %v1781 = vmul.f32 %v1747, %v1752
    %v1782 = vmul.f32 %v1747, %v1756
    %v1783 = vmul.f32 %v1747, %v1760
    %v1784 = vmul.f32 %v1747, %v1764
    %v1785 = vmul.f32 %v1747, %v1768
    %v1786 = vmul.f32 %v1747, %v1772
    %v1787 = vmul.f32 %v1747, %v1776
    %v1788 = vmul.f32 %v1747, %v1780
    %v1789 = vadd.f32 %v1737, %v1781
    %v1790 = vadd.f32 %v1738, %v1782
    %v1791 = vadd.f32 %v1739, %v1783
    %v1792 = vadd.f32 %v1740, %v1784
    %v1793 = vadd.f32 %v1741, %v1785
    %v1794 = vadd.f32 %v1742, %v1786
    %v1795 = vadd.f32 %v1743, %v1787
    %v1796 = vadd.f32 %v1744, %v1788
    %1797 = vset.pattern.permute.xlu0 20
    %1798 = vperm.xlu0 %1797, %v23
    %v1799 = vpop.permute.xlu0 %1798
    %v1801 = vlaneseq
    %v1802 = vshrl.u32 %v1801, 7
    %v1803 = vsub.s32 4, %v1802
    %v1804 = vrot.slane %v736, %v1803
    %v1805 = vlaneseq
    %v1806 = vshrl.u32 %v1805, 7
    %v1807 = vsub.s32 4, %v1806
    %v1808 = vrot.slane %v737, %v1807
    %v1809 = vlaneseq
    %v1810 = vshrl.u32 %v1809, 7
    %v1811 = vsub.s32 4, %v1810
    %v1812 = vrot.slane %v738, %v1811
    %v1813 = vlaneseq
    %v1814 = vshrl.u32 %v1813, 7
    %v1815 = vsub.s32 4, %v1814
    %v1816 = vrot.slane %v739, %v1815
    %v1817 = vlaneseq
    %v1818 = vshrl.u32 %v1817, 7
    %v1819 = vsub.s32 4, %v1818
    %v1820 = vrot.slane %v740, %v1819
    %v1821 = vlaneseq
    %v1822 = vshrl.u32 %v1821, 7
    %v1823 = vsub.s32 4, %v1822
    %v1824 = vrot.slane %v741, %v1823
    %v1825 = vlaneseq
    %v1826 = vshrl.u32 %v1825, 7
    %v1827 = vsub.s32 4, %v1826
    %v1828 = vrot.slane %v742, %v1827
    %v1829 = vlaneseq
    %v1830 = vshrl.u32 %v1829, 7
    %v1831 = vsub.s32 4, %v1830
    %v1832 = vrot.slane %v743, %v1831
    %v1833 = vmul.f32 %v1799, %v1804
    %v1834 = vmul.f32 %v1799, %v1808
    %v1835 = vmul.f32 %v1799, %v1812
    %v1836 = vmul.f32 %v1799, %v1816
    %v1837 = vmul.f32 %v1799, %v1820
    %v1838 = vmul.f32 %v1799, %v1824
    %v1839 = vmul.f32 %v1799, %v1828
    %v1840 = vmul.f32 %v1799, %v1832
    %v1841 = vadd.f32 %v1789, %v1833
    %v1842 = vadd.f32 %v1790, %v1834
    %v1843 = vadd.f32 %v1791, %v1835
    %v1844 = vadd.f32 %v1792, %v1836
    %v1845 = vadd.f32 %v1793, %v1837
    %v1846 = vadd.f32 %v1794, %v1838
    %v1847 = vadd.f32 %v1795, %v1839
    %v1848 = vadd.f32 %v1796, %v1840
    %1849 = vset.pattern.permute.xlu0 21
    %1850 = vperm.xlu0 %1849, %v23
    %v1851 = vpop.permute.xlu0 %1850
    %v1853 = vlaneseq
    %v1854 = vshrl.u32 %v1853, 7
    %v1855 = vsub.s32 5, %v1854
    %v1856 = vrot.slane %v736, %v1855
    %v1857 = vlaneseq
    %v1858 = vshrl.u32 %v1857, 7
    %v1859 = vsub.s32 5, %v1858
    %v1860 = vrot.slane %v737, %v1859
    %v1861 = vlaneseq
    %v1862 = vshrl.u32 %v1861, 7
    %v1863 = vsub.s32 5, %v1862
    %v1864 = vrot.slane %v738, %v1863
    %v1865 = vlaneseq
    %v1866 = vshrl.u32 %v1865, 7
    %v1867 = vsub.s32 5, %v1866
    %v1868 = vrot.slane %v739, %v1867
    %v1869 = vlaneseq
    %v1870 = vshrl.u32 %v1869, 7
    %v1871 = vsub.s32 5, %v1870
    %v1872 = vrot.slane %v740, %v1871
    %v1873 = vlaneseq
    %v1874 = vshrl.u32 %v1873, 7
    %v1875 = vsub.s32 5, %v1874
    %v1876 = vrot.slane %v741, %v1875
    %v1877 = vlaneseq
    %v1878 = vshrl.u32 %v1877, 7
    %v1879 = vsub.s32 5, %v1878
    %v1880 = vrot.slane %v742, %v1879
    %v1881 = vlaneseq
    %v1882 = vshrl.u32 %v1881, 7
    %v1883 = vsub.s32 5, %v1882
    %v1884 = vrot.slane %v743, %v1883
    %v1885 = vmul.f32 %v1851, %v1856
    %v1886 = vmul.f32 %v1851, %v1860
    %v1887 = vmul.f32 %v1851, %v1864
    %v1888 = vmul.f32 %v1851, %v1868
    %v1889 = vmul.f32 %v1851, %v1872
    %v1890 = vmul.f32 %v1851, %v1876
    %v1891 = vmul.f32 %v1851, %v1880
    %v1892 = vmul.f32 %v1851, %v1884
    %v1893 = vadd.f32 %v1841, %v1885
    %v1894 = vadd.f32 %v1842, %v1886
    %v1895 = vadd.f32 %v1843, %v1887
    %v1896 = vadd.f32 %v1844, %v1888
    %v1897 = vadd.f32 %v1845, %v1889
    %v1898 = vadd.f32 %v1846, %v1890
    %v1899 = vadd.f32 %v1847, %v1891
    %v1900 = vadd.f32 %v1848, %v1892
    %1901 = vset.pattern.permute.xlu0 22
    %1902 = vperm.xlu0 %1901, %v23
    %v1903 = vpop.permute.xlu0 %1902
    %v1905 = vlaneseq
    %v1906 = vshrl.u32 %v1905, 7
    %v1907 = vsub.s32 6, %v1906
    %v1908 = vrot.slane %v736, %v1907
    %v1909 = vlaneseq
    %v1910 = vshrl.u32 %v1909, 7
    %v1911 = vsub.s32 6, %v1910
    %v1912 = vrot.slane %v737, %v1911
    %v1913 = vlaneseq
    %v1914 = vshrl.u32 %v1913, 7
    %v1915 = vsub.s32 6, %v1914
    %v1916 = vrot.slane %v738, %v1915
    %v1917 = vlaneseq
    %v1918 = vshrl.u32 %v1917, 7
    %v1919 = vsub.s32 6, %v1918
    %v1920 = vrot.slane %v739, %v1919
    %v1921 = vlaneseq
    %v1922 = vshrl.u32 %v1921, 7
    %v1923 = vsub.s32 6, %v1922
    %v1924 = vrot.slane %v740, %v1923
    %v1925 = vlaneseq
    %v1926 = vshrl.u32 %v1925, 7
    %v1927 = vsub.s32 6, %v1926
    %v1928 = vrot.slane %v741, %v1927
    %v1929 = vlaneseq
    %v1930 = vshrl.u32 %v1929, 7
    %v1931 = vsub.s32 6, %v1930
    %v1932 = vrot.slane %v742, %v1931
    %v1933 = vlaneseq
    %v1934 = vshrl.u32 %v1933, 7
    %v1935 = vsub.s32 6, %v1934
    %v1936 = vrot.slane %v743, %v1935
    %v1937 = vmul.f32 %v1903, %v1908
    %v1938 = vmul.f32 %v1903, %v1912
    %v1939 = vmul.f32 %v1903, %v1916
    %v1940 = vmul.f32 %v1903, %v1920
    %v1941 = vmul.f32 %v1903, %v1924
    %v1942 = vmul.f32 %v1903, %v1928
    %v1943 = vmul.f32 %v1903, %v1932
    %v1944 = vmul.f32 %v1903, %v1936
    %v1945 = vadd.f32 %v1893, %v1937
    %v1946 = vadd.f32 %v1894, %v1938
    %v1947 = vadd.f32 %v1895, %v1939
    %v1948 = vadd.f32 %v1896, %v1940
    %v1949 = vadd.f32 %v1897, %v1941
    %v1950 = vadd.f32 %v1898, %v1942
    %v1951 = vadd.f32 %v1899, %v1943
    %v1952 = vadd.f32 %v1900, %v1944
    %1953 = vset.pattern.permute.xlu0 23
    %1954 = vperm.xlu0 %1953, %v23
    %v1955 = vpop.permute.xlu0 %1954
    %v1957 = vlaneseq
    %v1958 = vshrl.u32 %v1957, 7
    %v1959 = vsub.s32 7, %v1958
    %v1960 = vrot.slane %v736, %v1959
    %v1961 = vlaneseq
    %v1962 = vshrl.u32 %v1961, 7
    %v1963 = vsub.s32 7, %v1962
    %v1964 = vrot.slane %v737, %v1963
    %v1965 = vlaneseq
    %v1966 = vshrl.u32 %v1965, 7
    %v1967 = vsub.s32 7, %v1966
    %v1968 = vrot.slane %v738, %v1967
    %v1969 = vlaneseq
    %v1970 = vshrl.u32 %v1969, 7
    %v1971 = vsub.s32 7, %v1970
    %v1972 = vrot.slane %v739, %v1971
    %v1973 = vlaneseq
    %v1974 = vshrl.u32 %v1973, 7
    %v1975 = vsub.s32 7, %v1974
    %v1976 = vrot.slane %v740, %v1975
    %v1977 = vlaneseq
    %v1978 = vshrl.u32 %v1977, 7
    %v1979 = vsub.s32 7, %v1978
    %v1980 = vrot.slane %v741, %v1979
    %v1981 = vlaneseq
    %v1982 = vshrl.u32 %v1981, 7
    %v1983 = vsub.s32 7, %v1982
    %v1984 = vrot.slane %v742, %v1983
    %v1985 = vlaneseq
    %v1986 = vshrl.u32 %v1985, 7
    %v1987 = vsub.s32 7, %v1986
    %v1988 = vrot.slane %v743, %v1987
    %v1989 = vmul.f32 %v1955, %v1960
    %v1990 = vmul.f32 %v1955, %v1964
    %v1991 = vmul.f32 %v1955, %v1968
    %v1992 = vmul.f32 %v1955, %v1972
    %v1993 = vmul.f32 %v1955, %v1976
    %v1994 = vmul.f32 %v1955, %v1980
    %v1995 = vmul.f32 %v1955, %v1984
    %v1996 = vmul.f32 %v1955, %v1988
    %v1997 = vadd.f32 %v1945, %v1989
    %v1998 = vadd.f32 %v1946, %v1990
    %v1999 = vadd.f32 %v1947, %v1991
    %v2000 = vadd.f32 %v1948, %v1992
    %v2001 = vadd.f32 %v1949, %v1993
    %v2002 = vadd.f32 %v1950, %v1994
    %v2003 = vadd.f32 %v1951, %v1995
    %v2004 = vadd.f32 %v1952, %v1996
    %2005 = vset.pattern.permute.xlu0 24
    %2006 = vperm.xlu0 %2005, %v23
    %v2007 = vpop.permute.xlu0 %2006
    %v2009 = vlaneseq
    %v2010 = vshrl.u32 %v2009, 7
    %v2011 = vsub.s32 0, %v2010
    %v2012 = vrot.slane %v744, %v2011
    %v2013 = vlaneseq
    %v2014 = vshrl.u32 %v2013, 7
    %v2015 = vsub.s32 0, %v2014
    %v2016 = vrot.slane %v745, %v2015
    %v2017 = vlaneseq
    %v2018 = vshrl.u32 %v2017, 7
    %v2019 = vsub.s32 0, %v2018
    %v2020 = vrot.slane %v746, %v2019
    %v2021 = vlaneseq
    %v2022 = vshrl.u32 %v2021, 7
    %v2023 = vsub.s32 0, %v2022
    %v2024 = vrot.slane %v747, %v2023
    %v2025 = vlaneseq
    %v2026 = vshrl.u32 %v2025, 7
    %v2027 = vsub.s32 0, %v2026
    %v2028 = vrot.slane %v748, %v2027
    %v2029 = vlaneseq
    %v2030 = vshrl.u32 %v2029, 7
    %v2031 = vsub.s32 0, %v2030
    %v2032 = vrot.slane %v749, %v2031
    %v2033 = vlaneseq
    %v2034 = vshrl.u32 %v2033, 7
    %v2035 = vsub.s32 0, %v2034
    %v2036 = vrot.slane %v750, %v2035
    %v2037 = vlaneseq
    %v2038 = vshrl.u32 %v2037, 7
    %v2039 = vsub.s32 0, %v2038
    %v2040 = vrot.slane %v751, %v2039
    %v2041 = vmul.f32 %v2007, %v2012
    %v2042 = vmul.f32 %v2007, %v2016
    %v2043 = vmul.f32 %v2007, %v2020
    %v2044 = vmul.f32 %v2007, %v2024
    %v2045 = vmul.f32 %v2007, %v2028
    %v2046 = vmul.f32 %v2007, %v2032
    %v2047 = vmul.f32 %v2007, %v2036
    %v2048 = vmul.f32 %v2007, %v2040
    %v2049 = vadd.f32 %v1997, %v2041
    %v2050 = vadd.f32 %v1998, %v2042
    %v2051 = vadd.f32 %v1999, %v2043
    %v2052 = vadd.f32 %v2000, %v2044
    %v2053 = vadd.f32 %v2001, %v2045
    %v2054 = vadd.f32 %v2002, %v2046
    %v2055 = vadd.f32 %v2003, %v2047
    %v2056 = vadd.f32 %v2004, %v2048
    %2057 = vset.pattern.permute.xlu0 25
    %2058 = vperm.xlu0 %2057, %v23
    %v2059 = vpop.permute.xlu0 %2058
    %v2061 = vlaneseq
    %v2062 = vshrl.u32 %v2061, 7
    %v2063 = vsub.s32 1, %v2062
    %v2064 = vrot.slane %v744, %v2063
    %v2065 = vlaneseq
    %v2066 = vshrl.u32 %v2065, 7
    %v2067 = vsub.s32 1, %v2066
    %v2068 = vrot.slane %v745, %v2067
    %v2069 = vlaneseq
    %v2070 = vshrl.u32 %v2069, 7
    %v2071 = vsub.s32 1, %v2070
    %v2072 = vrot.slane %v746, %v2071
    %v2073 = vlaneseq
    %v2074 = vshrl.u32 %v2073, 7
    %v2075 = vsub.s32 1, %v2074
    %v2076 = vrot.slane %v747, %v2075
    %v2077 = vlaneseq
    %v2078 = vshrl.u32 %v2077, 7
    %v2079 = vsub.s32 1, %v2078
    %v2080 = vrot.slane %v748, %v2079
    %v2081 = vlaneseq
    %v2082 = vshrl.u32 %v2081, 7
    %v2083 = vsub.s32 1, %v2082
    %v2084 = vrot.slane %v749, %v2083
    %v2085 = vlaneseq
    %v2086 = vshrl.u32 %v2085, 7
    %v2087 = vsub.s32 1, %v2086
    %v2088 = vrot.slane %v750, %v2087
    %v2089 = vlaneseq
    %v2090 = vshrl.u32 %v2089, 7
    %v2091 = vsub.s32 1, %v2090
    %v2092 = vrot.slane %v751, %v2091
    %v2093 = vmul.f32 %v2059, %v2064
    %v2094 = vmul.f32 %v2059, %v2068
    %v2095 = vmul.f32 %v2059, %v2072
    %v2096 = vmul.f32 %v2059, %v2076
    %v2097 = vmul.f32 %v2059, %v2080
    %v2098 = vmul.f32 %v2059, %v2084
    %v2099 = vmul.f32 %v2059, %v2088
    %v2100 = vmul.f32 %v2059, %v2092
    %v2101 = vadd.f32 %v2049, %v2093
    %v2102 = vadd.f32 %v2050, %v2094
    %v2103 = vadd.f32 %v2051, %v2095
    %v2104 = vadd.f32 %v2052, %v2096
    %v2105 = vadd.f32 %v2053, %v2097
    %v2106 = vadd.f32 %v2054, %v2098
    %v2107 = vadd.f32 %v2055, %v2099
    %v2108 = vadd.f32 %v2056, %v2100
    %2109 = vset.pattern.permute.xlu0 26
    %2110 = vperm.xlu0 %2109, %v23
    %v2111 = vpop.permute.xlu0 %2110
    %v2113 = vlaneseq
    %v2114 = vshrl.u32 %v2113, 7
    %v2115 = vsub.s32 2, %v2114
    %v2116 = vrot.slane %v744, %v2115
    %v2117 = vlaneseq
    %v2118 = vshrl.u32 %v2117, 7
    %v2119 = vsub.s32 2, %v2118
    %v2120 = vrot.slane %v745, %v2119
    %v2121 = vlaneseq
    %v2122 = vshrl.u32 %v2121, 7
    %v2123 = vsub.s32 2, %v2122
    %v2124 = vrot.slane %v746, %v2123
    %v2125 = vlaneseq
    %v2126 = vshrl.u32 %v2125, 7
    %v2127 = vsub.s32 2, %v2126
    %v2128 = vrot.slane %v747, %v2127
    %v2129 = vlaneseq
    %v2130 = vshrl.u32 %v2129, 7
    %v2131 = vsub.s32 2, %v2130
    %v2132 = vrot.slane %v748, %v2131
    %v2133 = vlaneseq
    %v2134 = vshrl.u32 %v2133, 7
    %v2135 = vsub.s32 2, %v2134
    %v2136 = vrot.slane %v749, %v2135
    %v2137 = vlaneseq
    %v2138 = vshrl.u32 %v2137, 7
    %v2139 = vsub.s32 2, %v2138
    %v2140 = vrot.slane %v750, %v2139
    %v2141 = vlaneseq
    %v2142 = vshrl.u32 %v2141, 7
    %v2143 = vsub.s32 2, %v2142
    %v2144 = vrot.slane %v751, %v2143
    %v2145 = vmul.f32 %v2111, %v2116
    %v2146 = vmul.f32 %v2111, %v2120
    %v2147 = vmul.f32 %v2111, %v2124
    %v2148 = vmul.f32 %v2111, %v2128
    %v2149 = vmul.f32 %v2111, %v2132
    %v2150 = vmul.f32 %v2111, %v2136
    %v2151 = vmul.f32 %v2111, %v2140
    %v2152 = vmul.f32 %v2111, %v2144
    %v2153 = vadd.f32 %v2101, %v2145
    %v2154 = vadd.f32 %v2102, %v2146
    %v2155 = vadd.f32 %v2103, %v2147
    %v2156 = vadd.f32 %v2104, %v2148
    %v2157 = vadd.f32 %v2105, %v2149
    %v2158 = vadd.f32 %v2106, %v2150
    %v2159 = vadd.f32 %v2107, %v2151
    %v2160 = vadd.f32 %v2108, %v2152
    %2161 = vset.pattern.permute.xlu0 27
    %2162 = vperm.xlu0 %2161, %v23
    %v2163 = vpop.permute.xlu0 %2162
    %v2165 = vlaneseq
    %v2166 = vshrl.u32 %v2165, 7
    %v2167 = vsub.s32 3, %v2166
    %v2168 = vrot.slane %v744, %v2167
    %v2169 = vlaneseq
    %v2170 = vshrl.u32 %v2169, 7
    %v2171 = vsub.s32 3, %v2170
    %v2172 = vrot.slane %v745, %v2171
    %v2173 = vlaneseq
    %v2174 = vshrl.u32 %v2173, 7
    %v2175 = vsub.s32 3, %v2174
    %v2176 = vrot.slane %v746, %v2175
    %v2177 = vlaneseq
    %v2178 = vshrl.u32 %v2177, 7
    %v2179 = vsub.s32 3, %v2178
    %v2180 = vrot.slane %v747, %v2179
    %v2181 = vlaneseq
    %v2182 = vshrl.u32 %v2181, 7
    %v2183 = vsub.s32 3, %v2182
    %v2184 = vrot.slane %v748, %v2183
    %v2185 = vlaneseq
    %v2186 = vshrl.u32 %v2185, 7
    %v2187 = vsub.s32 3, %v2186
    %v2188 = vrot.slane %v749, %v2187
    %v2189 = vlaneseq
    %v2190 = vshrl.u32 %v2189, 7
    %v2191 = vsub.s32 3, %v2190
    %v2192 = vrot.slane %v750, %v2191
    %v2193 = vlaneseq
    %v2194 = vshrl.u32 %v2193, 7
    %v2195 = vsub.s32 3, %v2194
    %v2196 = vrot.slane %v751, %v2195
    %v2197 = vmul.f32 %v2163, %v2168
    %v2198 = vmul.f32 %v2163, %v2172
    %v2199 = vmul.f32 %v2163, %v2176
    %v2200 = vmul.f32 %v2163, %v2180
    %v2201 = vmul.f32 %v2163, %v2184
    %v2202 = vmul.f32 %v2163, %v2188
    %v2203 = vmul.f32 %v2163, %v2192
    %v2204 = vmul.f32 %v2163, %v2196
    %v2205 = vadd.f32 %v2153, %v2197
    %v2206 = vadd.f32 %v2154, %v2198
    %v2207 = vadd.f32 %v2155, %v2199
    %v2208 = vadd.f32 %v2156, %v2200
    %v2209 = vadd.f32 %v2157, %v2201
    %v2210 = vadd.f32 %v2158, %v2202
    %v2211 = vadd.f32 %v2159, %v2203
    %v2212 = vadd.f32 %v2160, %v2204
    %2213 = vset.pattern.permute.xlu0 28
    %2214 = vperm.xlu0 %2213, %v23
    %v2215 = vpop.permute.xlu0 %2214
    %v2217 = vlaneseq
    %v2218 = vshrl.u32 %v2217, 7
    %v2219 = vsub.s32 4, %v2218
    %v2220 = vrot.slane %v744, %v2219
    %v2221 = vlaneseq
    %v2222 = vshrl.u32 %v2221, 7
    %v2223 = vsub.s32 4, %v2222
    %v2224 = vrot.slane %v745, %v2223
    %v2225 = vlaneseq
    %v2226 = vshrl.u32 %v2225, 7
    %v2227 = vsub.s32 4, %v2226
    %v2228 = vrot.slane %v746, %v2227
    %v2229 = vlaneseq
    %v2230 = vshrl.u32 %v2229, 7
    %v2231 = vsub.s32 4, %v2230
    %v2232 = vrot.slane %v747, %v2231
    %v2233 = vlaneseq
    %v2234 = vshrl.u32 %v2233, 7
    %v2235 = vsub.s32 4, %v2234
    %v2236 = vrot.slane %v748, %v2235
    %v2237 = vlaneseq
    %v2238 = vshrl.u32 %v2237, 7
    %v2239 = vsub.s32 4, %v2238
    %v2240 = vrot.slane %v749, %v2239
    %v2241 = vlaneseq
    %v2242 = vshrl.u32 %v2241, 7
    %v2243 = vsub.s32 4, %v2242
    %v2244 = vrot.slane %v750, %v2243
    %v2245 = vlaneseq
    %v2246 = vshrl.u32 %v2245, 7
    %v2247 = vsub.s32 4, %v2246
    %v2248 = vrot.slane %v751, %v2247
    %v2249 = vmul.f32 %v2215, %v2220
    %v2250 = vmul.f32 %v2215, %v2224
    %v2251 = vmul.f32 %v2215, %v2228
    %v2252 = vmul.f32 %v2215, %v2232
    %v2253 = vmul.f32 %v2215, %v2236
    %v2254 = vmul.f32 %v2215, %v2240
    %v2255 = vmul.f32 %v2215, %v2244
    %v2256 = vmul.f32 %v2215, %v2248
    %v2257 = vadd.f32 %v2205, %v2249
    %v2258 = vadd.f32 %v2206, %v2250
    %v2259 = vadd.f32 %v2207, %v2251
    %v2260 = vadd.f32 %v2208, %v2252
    %v2261 = vadd.f32 %v2209, %v2253
    %v2262 = vadd.f32 %v2210, %v2254
    %v2263 = vadd.f32 %v2211, %v2255
    %v2264 = vadd.f32 %v2212, %v2256
    %2265 = vset.pattern.permute.xlu0 29
    %2266 = vperm.xlu0 %2265, %v23
    %v2267 = vpop.permute.xlu0 %2266
    %v2269 = vlaneseq
    %v2270 = vshrl.u32 %v2269, 7
    %v2271 = vsub.s32 5, %v2270
    %v2272 = vrot.slane %v744, %v2271
    %v2273 = vlaneseq
    %v2274 = vshrl.u32 %v2273, 7
    %v2275 = vsub.s32 5, %v2274
    %v2276 = vrot.slane %v745, %v2275
    %v2277 = vlaneseq
    %v2278 = vshrl.u32 %v2277, 7
    %v2279 = vsub.s32 5, %v2278
    %v2280 = vrot.slane %v746, %v2279
    %v2281 = vlaneseq
    %v2282 = vshrl.u32 %v2281, 7
    %v2283 = vsub.s32 5, %v2282
    %v2284 = vrot.slane %v747, %v2283
    %v2285 = vlaneseq
    %v2286 = vshrl.u32 %v2285, 7
    %v2287 = vsub.s32 5, %v2286
    %v2288 = vrot.slane %v748, %v2287
    %v2289 = vlaneseq
    %v2290 = vshrl.u32 %v2289, 7
    %v2291 = vsub.s32 5, %v2290
    %v2292 = vrot.slane %v749, %v2291
    %v2293 = vlaneseq
    %v2294 = vshrl.u32 %v2293, 7
    %v2295 = vsub.s32 5, %v2294
    %v2296 = vrot.slane %v750, %v2295
    %v2297 = vlaneseq
    %v2298 = vshrl.u32 %v2297, 7
    %v2299 = vsub.s32 5, %v2298
    %v2300 = vrot.slane %v751, %v2299
    %v2301 = vmul.f32 %v2267, %v2272
    %v2302 = vmul.f32 %v2267, %v2276
    %v2303 = vmul.f32 %v2267, %v2280
    %v2304 = vmul.f32 %v2267, %v2284
    %v2305 = vmul.f32 %v2267, %v2288
    %v2306 = vmul.f32 %v2267, %v2292
    %v2307 = vmul.f32 %v2267, %v2296
    %v2308 = vmul.f32 %v2267, %v2300
    %v2309 = vadd.f32 %v2257, %v2301
    %v2310 = vadd.f32 %v2258, %v2302
    %v2311 = vadd.f32 %v2259, %v2303
    %v2312 = vadd.f32 %v2260, %v2304
    %v2313 = vadd.f32 %v2261, %v2305
    %v2314 = vadd.f32 %v2262, %v2306
    %v2315 = vadd.f32 %v2263, %v2307
    %v2316 = vadd.f32 %v2264, %v2308
    %2317 = vset.pattern.permute.xlu0 30
    %2318 = vperm.xlu0 %2317, %v23
    %v2319 = vpop.permute.xlu0 %2318
    %v2321 = vlaneseq
    %v2322 = vshrl.u32 %v2321, 7
    %v2323 = vsub.s32 6, %v2322
    %v2324 = vrot.slane %v744, %v2323
    %v2325 = vlaneseq
    %v2326 = vshrl.u32 %v2325, 7
    %v2327 = vsub.s32 6, %v2326
    %v2328 = vrot.slane %v745, %v2327
    %v2329 = vlaneseq
    %v2330 = vshrl.u32 %v2329, 7
    %v2331 = vsub.s32 6, %v2330
    %v2332 = vrot.slane %v746, %v2331
    %v2333 = vlaneseq
    %v2334 = vshrl.u32 %v2333, 7
    %v2335 = vsub.s32 6, %v2334
    %v2336 = vrot.slane %v747, %v2335
    %v2337 = vlaneseq
    %v2338 = vshrl.u32 %v2337, 7
    %v2339 = vsub.s32 6, %v2338
    %v2340 = vrot.slane %v748, %v2339
    %v2341 = vlaneseq
    %v2342 = vshrl.u32 %v2341, 7
    %v2343 = vsub.s32 6, %v2342
    %v2344 = vrot.slane %v749, %v2343
    %v2345 = vlaneseq
    %v2346 = vshrl.u32 %v2345, 7
    %v2347 = vsub.s32 6, %v2346
    %v2348 = vrot.slane %v750, %v2347
    %v2349 = vlaneseq
    %v2350 = vshrl.u32 %v2349, 7
    %v2351 = vsub.s32 6, %v2350
    %v2352 = vrot.slane %v751, %v2351
    %v2353 = vmul.f32 %v2319, %v2324
    %v2354 = vmul.f32 %v2319, %v2328
    %v2355 = vmul.f32 %v2319, %v2332
    %v2356 = vmul.f32 %v2319, %v2336
    %v2357 = vmul.f32 %v2319, %v2340
    %v2358 = vmul.f32 %v2319, %v2344
    %v2359 = vmul.f32 %v2319, %v2348
    %v2360 = vmul.f32 %v2319, %v2352
    %v2361 = vadd.f32 %v2309, %v2353
    %v2362 = vadd.f32 %v2310, %v2354
    %v2363 = vadd.f32 %v2311, %v2355
    %v2364 = vadd.f32 %v2312, %v2356
    %v2365 = vadd.f32 %v2313, %v2357
    %v2366 = vadd.f32 %v2314, %v2358
    %v2367 = vadd.f32 %v2315, %v2359
    %v2368 = vadd.f32 %v2316, %v2360
    %2369 = vset.pattern.permute.xlu0 31
    %2370 = vperm.xlu0 %2369, %v23
    %v2371 = vpop.permute.xlu0 %2370
    %v2373 = vlaneseq
    %v2374 = vshrl.u32 %v2373, 7
    %v2375 = vsub.s32 7, %v2374
    %v2376 = vrot.slane %v744, %v2375
    %v2377 = vlaneseq
    %v2378 = vshrl.u32 %v2377, 7
    %v2379 = vsub.s32 7, %v2378
    %v2380 = vrot.slane %v745, %v2379
    %v2381 = vlaneseq
    %v2382 = vshrl.u32 %v2381, 7
    %v2383 = vsub.s32 7, %v2382
    %v2384 = vrot.slane %v746, %v2383
    %v2385 = vlaneseq
    %v2386 = vshrl.u32 %v2385, 7
    %v2387 = vsub.s32 7, %v2386
    %v2388 = vrot.slane %v747, %v2387
    %v2389 = vlaneseq
    %v2390 = vshrl.u32 %v2389, 7
    %v2391 = vsub.s32 7, %v2390
    %v2392 = vrot.slane %v748, %v2391
    %v2393 = vlaneseq
    %v2394 = vshrl.u32 %v2393, 7
    %v2395 = vsub.s32 7, %v2394
    %v2396 = vrot.slane %v749, %v2395
    %v2397 = vlaneseq
    %v2398 = vshrl.u32 %v2397, 7
    %v2399 = vsub.s32 7, %v2398
    %v2400 = vrot.slane %v750, %v2399
    %v2401 = vlaneseq
    %v2402 = vshrl.u32 %v2401, 7
    %v2403 = vsub.s32 7, %v2402
    %v2404 = vrot.slane %v751, %v2403
    %v2405 = vmul.f32 %v2371, %v2376
    %v2406 = vmul.f32 %v2371, %v2380
    %v2407 = vmul.f32 %v2371, %v2384
    %v2408 = vmul.f32 %v2371, %v2388
    %v2409 = vmul.f32 %v2371, %v2392
    %v2410 = vmul.f32 %v2371, %v2396
    %v2411 = vmul.f32 %v2371, %v2400
    %v2412 = vmul.f32 %v2371, %v2404
    %v2413 = vadd.f32 %v2361, %v2405
    %v2414 = vadd.f32 %v2362, %v2406
    %v2415 = vadd.f32 %v2363, %v2407
    %v2416 = vadd.f32 %v2364, %v2408
    %v2417 = vadd.f32 %v2365, %v2409
    %v2418 = vadd.f32 %v2366, %v2410
    %v2419 = vadd.f32 %v2367, %v2411
    %v2420 = vadd.f32 %v2368, %v2412
    %vm2421 = vcmp.gt.f32.partialorder %v2413, 0.0
    %vm2422 = vcmp.gt.f32.partialorder %v2414, 0.0
    %vm2423 = vcmp.gt.f32.partialorder %v2415, 0.0
    %vm2424 = vcmp.gt.f32.partialorder %v2416, 0.0
    %vm2425 = vcmp.gt.f32.partialorder %v2417, 0.0
    %vm2426 = vcmp.gt.f32.partialorder %v2418, 0.0
    %vm2427 = vcmp.gt.f32.partialorder %v2419, 0.0
    %vm2428 = vcmp.gt.f32.partialorder %v2420, 0.0
    %v2429 = vmul.f32 %v2413, 0.01
    %v2430 = vmul.f32 %v2414, 0.01
    %v2431 = vmul.f32 %v2415, 0.01
    %v2432 = vmul.f32 %v2416, 0.01
    %v2433 = vmul.f32 %v2417, 0.01
    %v2434 = vmul.f32 %v2418, 0.01
    %v2435 = vmul.f32 %v2419, 0.01
    %v2436 = vmul.f32 %v2420, 0.01
    %v2437 = vsel %vm2421, %v2413, %v2429
    %v2438 = vsel %vm2422, %v2414, %v2430
    %v2439 = vsel %vm2423, %v2415, %v2431
    %v2440 = vsel %vm2424, %v2416, %v2432
    %v2441 = vsel %vm2425, %v2417, %v2433
    %v2442 = vsel %vm2426, %v2418, %v2434
    %v2443 = vsel %vm2427, %v2419, %v2435
    %v2444 = vsel %vm2428, %v2420, %v2436
    %v2453 = vrot.slane %v2437, 1
    %v2454 = vrot.slane %v2438, 1
    %v2455 = vrot.slane %v2439, 1
    %v2456 = vrot.slane %v2440, 1
    %v2457 = vrot.slane %v2441, 1
    %v2458 = vrot.slane %v2442, 1
    %v2459 = vrot.slane %v2443, 1
    %v2460 = vrot.slane %v2444, 1
    %v2469 = vmax.f32 %v2437, %v2453
    %v2470 = vmax.f32 %v2438, %v2454
    %v2471 = vmax.f32 %v2439, %v2455
    %v2472 = vmax.f32 %v2440, %v2456
    %v2473 = vmax.f32 %v2441, %v2457
    %v2474 = vmax.f32 %v2442, %v2458
    %v2475 = vmax.f32 %v2443, %v2459
    %v2476 = vmax.f32 %v2444, %v2460
    %v2477 = vsub.f32 %v2437, %v2469
    %v2478 = vsub.f32 %v2438, %v2470
    %v2479 = vsub.f32 %v2439, %v2471
    %v2480 = vsub.f32 %v2440, %v2472
    %v2481 = vsub.f32 %v2441, %v2473
    %v2482 = vsub.f32 %v2442, %v2474
    %v2483 = vsub.f32 %v2443, %v2475
    %v2484 = vsub.f32 %v2444, %v2476
    %v2485 = vmul.f32 %v2477, 1.442695
    %v2486 = vpow.pop %v2485
    %v2487 = vmul.f32 %v2478, 1.442695
    %v2488 = vpow.pop %v2487
    %v2489 = vmul.f32 %v2479, 1.442695
    %v2490 = vpow.pop %v2489
    %v2491 = vmul.f32 %v2480, 1.442695
    %v2492 = vpow.pop %v2491
    %v2493 = vmul.f32 %v2481, 1.442695
    %v2494 = vpow.pop %v2493
    %v2495 = vmul.f32 %v2482, 1.442695
    %v2496 = vpow.pop %v2495
    %v2497 = vmul.f32 %v2483, 1.442695
    %v2498 = vpow.pop %v2497
    %v2499 = vmul.f32 %v2484, 1.442695
    %v2500 = vpow.pop %v2499
    %v2509 = vrot.slane %v2469, 7
    %v2510 = vrot.slane %v2470, 7
    %v2511 = vrot.slane %v2471, 7
    %v2512 = vrot.slane %v2472, 7
    %v2513 = vrot.slane %v2473, 7
    %v2514 = vrot.slane %v2474, 7
    %v2515 = vrot.slane %v2475, 7
    %v2516 = vrot.slane %v2476, 7
    %v2525 = vsub.f32 %v2437, %v2509
    %v2526 = vsub.f32 %v2438, %v2510
    %v2527 = vsub.f32 %v2439, %v2511
    %v2528 = vsub.f32 %v2440, %v2512
    %v2529 = vsub.f32 %v2441, %v2513
    %v2530 = vsub.f32 %v2442, %v2514
    %v2531 = vsub.f32 %v2443, %v2515
    %v2532 = vsub.f32 %v2444, %v2516
    %v2533 = vmul.f32 %v2525, 1.442695
    %v2534 = vpow.pop %v2533
    %v2535 = vmul.f32 %v2526, 1.442695
    %v2536 = vpow.pop %v2535
    %v2537 = vmul.f32 %v2527, 1.442695
    %v2538 = vpow.pop %v2537
    %v2539 = vmul.f32 %v2528, 1.442695
    %v2540 = vpow.pop %v2539
    %v2541 = vmul.f32 %v2529, 1.442695
    %v2542 = vpow.pop %v2541
    %v2543 = vmul.f32 %v2530, 1.442695
    %v2544 = vpow.pop %v2543
    %v2545 = vmul.f32 %v2531, 1.442695
    %v2546 = vpow.pop %v2545
    %v2547 = vmul.f32 %v2532, 1.442695
    %v2548 = vpow.pop %v2547
    %v2557 = vrot.slane %v2534, 1
    %v2558 = vrot.slane %v2536, 1
    %v2559 = vrot.slane %v2538, 1
    %v2560 = vrot.slane %v2540, 1
    %v2561 = vrot.slane %v2542, 1
    %v2562 = vrot.slane %v2544, 1
    %v2563 = vrot.slane %v2546, 1
    %v2564 = vrot.slane %v2548, 1
    %v2573 = vadd.f32 %v2486, %v2557
    %v2574 = vadd.f32 %v2488, %v2558
    %v2575 = vadd.f32 %v2490, %v2559
    %v2576 = vadd.f32 %v2492, %v2560
    %v2577 = vadd.f32 %v2494, %v2561
    %v2578 = vadd.f32 %v2496, %v2562
    %v2579 = vadd.f32 %v2498, %v2563
    %v2580 = vadd.f32 %v2500, %v2564
    %v2581 = vlog2.pop %v2573
    %v2582 = vmul.f32 %v2581, 0.6931472
    %v2583 = vlog2.pop %v2574
    %v2584 = vmul.f32 %v2583, 0.6931472
    %v2585 = vlog2.pop %v2575
    %v2586 = vmul.f32 %v2585, 0.6931472
    %v2587 = vlog2.pop %v2576
    %v2588 = vmul.f32 %v2587, 0.6931472
    %v2589 = vlog2.pop %v2577
    %v2590 = vmul.f32 %v2589, 0.6931472
    %v2591 = vlog2.pop %v2578
    %v2592 = vmul.f32 %v2591, 0.6931472
    %v2593 = vlog2.pop %v2579
    %v2594 = vmul.f32 %v2593, 0.6931472
    %v2595 = vlog2.pop %v2580
    %v2596 = vmul.f32 %v2595, 0.6931472
    %v2597 = vadd.f32 %v2469, %v2582
    %v2598 = vadd.f32 %v2470, %v2584
    %v2599 = vadd.f32 %v2471, %v2586
    %v2600 = vadd.f32 %v2472, %v2588
    %v2601 = vadd.f32 %v2473, %v2590
    %v2602 = vadd.f32 %v2474, %v2592
    %v2603 = vadd.f32 %v2475, %v2594
    %v2604 = vadd.f32 %v2476, %v2596
    %v2605 = vlaneseq
    %v2606 = vshrl.u32 %v2605, 7
    %v2607 = vsub.s32 0, %v2606
    %v2608 = vrot.slane %v2597, %v2607
    %v2609 = vlaneseq
    %v2610 = vshrl.u32 %v2609, 7
    %v2611 = vsub.s32 0, %v2610
    %v2612 = vrot.slane %v2598, %v2611
    %v2613 = vlaneseq
    %v2614 = vshrl.u32 %v2613, 7
    %v2615 = vsub.s32 0, %v2614
    %v2616 = vrot.slane %v2599, %v2615
    %v2617 = vlaneseq
    %v2618 = vshrl.u32 %v2617, 7
    %v2619 = vsub.s32 0, %v2618
    %v2620 = vrot.slane %v2600, %v2619
    %v2621 = vlaneseq
    %v2622 = vshrl.u32 %v2621, 7
    %v2623 = vsub.s32 0, %v2622
    %v2624 = vrot.slane %v2601, %v2623
    %v2625 = vlaneseq
    %v2626 = vshrl.u32 %v2625, 7
    %v2627 = vsub.s32 0, %v2626
    %v2628 = vrot.slane %v2602, %v2627
    %v2629 = vlaneseq
    %v2630 = vshrl.u32 %v2629, 7
    %v2631 = vsub.s32 0, %v2630
    %v2632 = vrot.slane %v2603, %v2631
    %v2633 = vlaneseq
    %v2634 = vshrl.u32 %v2633, 7
    %v2635 = vsub.s32 0, %v2634
    %v2636 = vrot.slane %v2604, %v2635
    %v2637 = vsub.f32 %v2437, %v2608
    %v2638 = vsub.f32 %v2438, %v2612
    %v2639 = vsub.f32 %v2439, %v2616
    %v2640 = vsub.f32 %v2440, %v2620
    %v2641 = vsub.f32 %v2441, %v2624
    %v2642 = vsub.f32 %v2442, %v2628
    %v2643 = vsub.f32 %v2443, %v2632
    %v2644 = vsub.f32 %v2444, %v2636
    %v2653 = vcombine.low %v2637, %v2638
    %v2654 = vcombine.low %v2639, %v2640
    %v2656 = vunpack.c.l.s4 1983009808
    %v2657 = vunpack.c.0.s8 %v2656
    %v2658 = vlaneseq
    %v2659 = vshrl.u32 %v2658, 7
    %v2660 = vsub.s32 %v2657, %v2659
    %v2661 = vrot.slane %v2653, %v2660
    %v2663 = vunpack.c.l.s4 1983009808
    %v2664 = vunpack.c.0.s8 %v2663
    %v2665 = vlaneseq
    %v2666 = vshrl.u32 %v2665, 7
    %v2667 = vsub.s32 %v2664, %v2666
    %v2668 = vrot.slane %v2654, %v2667
    %v2669 = vcombine.low %v2661, %v2668
    %v2670 = vcombine.low %v2641, %v2642
    %v2671 = vcombine.low %v2643, %v2644
    %v2673 = vunpack.c.l.s4 1983009808
    %v2674 = vunpack.c.0.s8 %v2673
    %v2675 = vlaneseq
    %v2676 = vshrl.u32 %v2675, 7
    %v2677 = vsub.s32 %v2674, %v2676
    %v2678 = vrot.slane %v2670, %v2677
    %v2680 = vunpack.c.l.s4 1983009808
    %v2681 = vunpack.c.0.s8 %v2680
    %v2682 = vlaneseq
    %v2683 = vshrl.u32 %v2682, 7
    %v2684 = vsub.s32 %v2681, %v2683
    %v2685 = vrot.slane %v2671, %v2684
    %v2686 = vcombine.low %v2678, %v2685
    %2689 = vst [vmem:[#allocation2] sm:$0xff] %v2669
    %2690 = vst [vmem:[#allocation2 + $0x8] sm:$0xff] %v2686
    // Predicated region
    $region14: #{policy_forward.1} parent=1 // pred_check
      _
    $region15: #{policy_forward.1} parent=1 // pred_check_branch
      %2692 = sbr.rel (0) target = $region17
    $region16: #{policy_forward.1} parent=1 // pred_region
      %s2694 = ssub.s32 256, 256
      %2695 = vsyncadd [#allocation3], %s2694
      %s2697 = sshll.u32 [#allocation2], 4
      %s2698 = int_to_ptr.vmem [resolvable:$true] %s2697
      %2700 = dma.vmem_to_hbm [thread:$0]  %s2698, 256, %s3, [#allocation3]
    $region17: #{policy_forward.1} parent=1 // pred_fallthru
      _
    // Predicated region
    $region18: #{policy_forward.1} parent=1 // pred_check
      _
    $region19: #{policy_forward.1} parent=1 // pred_check_branch
      %2702 = sbr.rel (0) target = $region21
    $region20: #{policy_forward.1} parent=1 // pred_region
      %2703 = dma.done [#allocation3], 256
    $region21: #{policy_forward.1} parent=1 // pred_fallthru
      _
    %2704 = vsyncpa [#allocation3], 1

</llo_original>
